<compile_context>
chip_gen: v5e
topology: v5e:2x2
jax: 0.10.0
libtpu: 0.0.40
codegen_flags: <defaults>
</compile_context>

<pallas_src>
import jax
import jax.numpy as jnp
from jax import lax
from jax.experimental import pallas as pl
from jax.experimental.pallas import tpu as pltpu


def _round_up(n, m):
    return ((n + m - 1) // m) * m


def _pack_gates(w, H, H_pad):
    """Reorder PyTorch gate blocks [i|f|g|o] -> [i|f|o|g] along the last axis
    and zero-pad each gate block from H to H_pad, so every gate slice inside
    the kernel is a whole number of 128-lane groups and sigmoid/tanh each
    apply to one contiguous region."""
    blocks = [w[..., 0 * H:1 * H],   # i
              w[..., 1 * H:2 * H],   # f
              w[..., 3 * H:4 * H],   # o
              w[..., 2 * H:3 * H]]   # g
    pad = [(0, 0)] * (w.ndim - 1) + [(0, H_pad - H)]
    return jnp.concatenate([jnp.pad(b, pad) for b in blocks], axis=-1)


# ---------------------------------------------------------------------------
# Kernel 1: LSTM recurrence -> last hidden state.
# ---------------------------------------------------------------------------
def lstm_recurrence_kernel(emb_ref, w_ih_ref, w_hh_ref, b_ref, h_out_ref,
                           pre_ref):
    T, B, D = emb_ref.shape
    H = w_hh_ref.shape[0]            # padded hidden size (multiple of 128)
    GH = 4 * H

    # Hoisted input projection: one large MXU matmul, bias broadcast added
    # once (not re-materialized per timestep).
    emb2d = emb_ref[...].reshape(T * B, D)                       # bf16
    pre = jnp.dot(emb2d, w_ih_ref[...],
                  preferred_element_type=jnp.float32) + b_ref[...]
    pre_ref[...] = pre.reshape(T, B, GH)

    w_hh = w_hh_ref[...]                                         # loop-invariant bf16

    def step(t, carry):
        h, c = carry                                             # f32 state
        gates = pre_ref[t] + jnp.dot(h.astype(jnp.bfloat16), w_hh,
                                     preferred_element_type=jnp.float32)
        # packed gate layout: [i | f | o | g], each H_pad wide (128-aligned)
        sig = jax.nn.sigmoid(gates[:, :3 * H])
        g_g = jnp.tanh(gates[:, 3 * H:])
        i_g = sig[:, 0 * H:1 * H]
        f_g = sig[:, 1 * H:2 * H]
        o_g = sig[:, 2 * H:3 * H]
        c_new = f_g * c + i_g * g_g
        h_new = o_g * jnp.tanh(c_new)
        return h_new, c_new

    h0 = jnp.zeros((B, H), jnp.float32)
    c0 = jnp.zeros((B, H), jnp.float32)
    # Fixed, small trip count -> unroll so the LLO scheduler can overlap
    # EUP (sigmoid/tanh), VPU and MXU work across iterations.
    h_last, _ = lax.fori_loop(0, T, step, (h0, c0), unroll=True)
    h_out_ref[...] = h_last.astype(h_out_ref.dtype)


# ---------------------------------------------------------------------------
# Kernel 2: output projection, tiled over the (padded) vocab axis.
# ---------------------------------------------------------------------------
def output_proj_kernel(h_ref, w_out_ref, out_ref):
    out_ref[...] = jnp.dot(h_ref[...], w_out_ref[...],
                           preferred_element_type=jnp.float32)


# ---------------------------------------------------------------------------
# Wrapper: padding / packing / bf16 casts, then two pallas_calls.
# ---------------------------------------------------------------------------
def lstm_lm_forward(contexts, params):
    """Forward pass equivalent to LSTMModel.forward.

    contexts: (B, T) int32 token ids.
    returns:  (B, V) float32 logits.
    """
    emb_table = params["embedding"]        # (V, D) f32
    w_ih_t = params["w_ih_t"]              # (D, 4H), blocks [i|f|g|o]
    w_hh_t = params["w_hh_t"]              # (H, 4H)
    b = params["b"]                        # (1, 4H) = b_ih + b_hh
    w_out_t = params["w_out_t"]            # (H, V)

    B, T = contexts.shape
    D = emb_table.shape[1]
    H = w_hh_t.shape[0]
    V = w_out_t.shape[1]

    # Pad to TPU-friendly sizes (sublane / lane / MXU alignment).
    B_pad = _round_up(B, 8)
    D_pad = _round_up(D, 128)
    H_pad = _round_up(H, 128)
    V_pad = _round_up(V, 128)
    GH = 4 * H_pad

    # Glue (gather, transpose, pad, casts) stays in XLA.
    emb = jnp.take(emb_table, contexts, axis=0)                  # (B, T, D)
    emb = jnp.transpose(emb, (1, 0, 2))                          # (T, B, D)
    emb = jnp.pad(emb, ((0, 0), (0, B_pad - B), (0, D_pad - D)))
    emb = emb.astype(jnp.bfloat16)

    w_ih_p = jnp.pad(_pack_gates(w_ih_t, H, H_pad),
                     ((0, D_pad - D), (0, 0))).astype(jnp.bfloat16)   # (D_pad, 4H_pad)
    w_hh_p = jnp.pad(_pack_gates(w_hh_t, H, H_pad),
                     ((0, H_pad - H), (0, 0))).astype(jnp.bfloat16)   # (H_pad, 4H_pad)
    b_p = _pack_gates(b, H, H_pad).astype(jnp.float32)                # (1, 4H_pad)
    w_out_p = jnp.pad(w_out_t, ((0, H_pad - H), (0, V_pad - V))
                      ).astype(jnp.bfloat16)                          # (H_pad, V_pad)

    vmem = pl.BlockSpec(memory_space=pltpu.MemorySpace.VMEM)
    vmem_limit = 32 * 1024 * 1024   # safe on v5e/v6e/v7x; tiny usage here

    # ---- kernel 1: LSTM recurrence -> last hidden state --------------------
    rec_cost = pl.CostEstimate(
        flops=int(2 * T * B_pad * D_pad * GH + 2 * T * B_pad * H_pad * GH),
        transcendentals=int(T * B_pad * 5 * H_pad),
        bytes_accessed=int(2 * (T * B_pad * D_pad + D_pad * GH + H_pad * GH
                                + B_pad * H_pad) + 4 * GH),
    )
    # TODO(synk): for long sequences / large D the (T, B, D) embeddings and
    # the pre-gate scratch should be streamed over T (BlockSpec grid or manual
    # double-buffer) to stay within v7x's 64 MiB VMEM.
    h_last = pl.pallas_call(
        lstm_recurrence_kernel,
        out_shape=jax.ShapeDtypeStruct((B_pad, H_pad), jnp.bfloat16),
        in_specs=[vmem] * 4,
        out_specs=vmem,
        scratch_shapes=[pltpu.VMEM((T, B_pad, GH), jnp.float32)],
        compiler_params=pltpu.CompilerParams(vmem_limit_bytes=vmem_limit),
        cost_estimate=rec_cost,
    )(emb, w_ih_p, w_hh_p, b_p)

    # ---- kernel 2: lane-dense, V-tiled output projection --------------------
    TN = 512 if V_pad % 512 == 0 else (256 if V_pad % 256 == 0 else 128)
    proj_cost = pl.CostEstimate(
        flops=int(2 * B_pad * H_pad * V_pad),
        transcendentals=0,
        bytes_accessed=int(2 * (B_pad * H_pad + H_pad * V_pad)
                           + 4 * B_pad * V_pad),
    )
    out = pl.pallas_call(
        output_proj_kernel,
        out_shape=jax.ShapeDtypeStruct((B_pad, V_pad), jnp.float32),
        grid=(V_pad // TN,),
        in_specs=[pl.BlockSpec((B_pad, H_pad), lambda j: (0, 0)),
                  pl.BlockSpec((H_pad, TN), lambda j: (0, j))],
        out_specs=pl.BlockSpec((B_pad, TN), lambda j: (0, j)),
        compiler_params=pltpu.CompilerParams(
            dimension_semantics=("parallel",),
            vmem_limit_bytes=vmem_limit),
        cost_estimate=proj_cost,
    )(h_last, w_out_p)

    return out[:B, :V]


# ---------------------------------------------------------------------------
# Pure-JAX reference (mirrors the kernel's bf16-matmul / f32-state numerics).
# ---------------------------------------------------------------------------
def lstm_lm_reference(contexts, params):
    emb = jnp.take(params["embedding"], contexts, axis=0)        # (B, T, D)
    w_ih = params["w_ih_t"].astype(jnp.bfloat16)
    w_hh = params["w_hh_t"].astype(jnp.bfloat16)
    b = params["b"]
    w_out = params["w_out_t"].astype(jnp.bfloat16)

    B, T, _ = emb.shape
    H = params["w_hh_t"].shape[0]
    x = emb.astype(jnp.bfloat16)
    h = jnp.zeros((B, H), jnp.float32)
    c = jnp.zeros((B, H), jnp.float32)
    for t in range(T):
        gates = (jnp.dot(x[:, t, :], w_ih, preferred_element_type=jnp.float32)
                 + jnp.dot(h.astype(jnp.bfloat16), w_hh,
                           preferred_element_type=jnp.float32)
                 + b)
        i_g = jax.nn.sigmoid(gates[:, 0 * H:1 * H])
        f_g = jax.nn.sigmoid(gates[:, 1 * H:2 * H])
        g_g = jnp.tanh(gates[:, 2 * H:3 * H])
        o_g = jax.nn.sigmoid(gates[:, 3 * H:4 * H])
        c = f_g * c + i_g * g_g
        h = o_g * jnp.tanh(c)
    return jnp.dot(h.astype(jnp.bfloat16), w_out,
                   preferred_element_type=jnp.float32)


def init_params(key, vocab_size, repr_dim, hidden_size):
    """Deterministic synthetic parameter init (matches nn.LSTM init ranges)."""
    k_emb, k_wih, k_whh, k_bih, k_bhh, k_out = jax.random.split(key, 6)
    bound = 1.0 / jnp.sqrt(hidden_size)
    params = {
        # nn.Embedding(vocab, repr_dim): N(0,1)
        "embedding": jax.random.normal(k_emb, (vocab_size, repr_dim),
                                       jnp.float32),
        # nn.LSTM weights, stored pre-transposed for x @ W layout.
        "w_ih_t": jax.random.uniform(k_wih, (repr_dim, 4 * hidden_size),
                                     jnp.float32, -bound, bound),
        "w_hh_t": jax.random.uniform(k_whh, (hidden_size, 4 * hidden_size),
                                     jnp.float32, -bound, bound),
        "b": (jax.random.uniform(k_bih, (1, 4 * hidden_size),
                                 jnp.float32, -bound, bound)
              + jax.random.uniform(k_bhh, (1, 4 * hidden_size),
                                   jnp.float32, -bound, bound)),
        # nn.Linear(hidden, vocab, bias=False), pre-transposed to (H, V).
        "w_out_t": jax.random.uniform(k_out, (hidden_size, vocab_size),
                                      jnp.float32, -bound, bound),
    }
    return params


if __name__ == "__main__":
    # Small shapes consistent with the module's forward pass.
    batch = 2
    seq_len = 8
    repr_dim = 16
    hidden_size = 32
    vocab_size = 64

    key = jax.random.PRNGKey(0)
    k_params, k_ctx = jax.random.split(key)
    params = init_params(k_params, vocab_size, repr_dim, hidden_size)
    contexts = jax.random.randint(k_ctx, (batch, seq_len), 0, vocab_size,
                                  dtype=jnp.int32)

    out = jax.block_until_ready(lstm_lm_forward(contexts, params))
    ref = jax.block_until_ready(lstm_lm_reference(contexts, params))

    assert out.shape == (batch, vocab_size)
    # bf16 matmul operands -> looser tolerance than the f32 version.
    assert jnp.allclose(out, ref, atol=2e-2, rtol=2e-2), "mismatch vs reference"

    print("KERNEL_OK")
</pallas_src>

<mosaic_0001>
module attributes {stable_mosaic.version = 11 : i64} {
  func.func @lstm_recurrence_kernel(%arg0: memref<8x8x128xbf16, #tpu.memory_space<vmem>>, %arg1: memref<128x512xbf16, #tpu.memory_space<vmem>>, %arg2: memref<128x512xbf16, #tpu.memory_space<vmem>>, %arg3: memref<1x512xf32, #tpu.memory_space<vmem>>, %arg4: memref<8x128xbf16, #tpu.memory_space<vmem>>, %arg5: memref<8x8x512xf32, #tpu.memory_space<vmem>>) attributes {dimension_semantics = [], scalar_prefetch = 0 : i64, scratch_operands = 1 : i64, tpu.core_type = #tpu.core_type<tc>} {
    %c0 = arith.constant 0 : index
    %c0_0 = arith.constant 0 : index
    %c0_1 = arith.constant 0 : index
    %0 = vector.load %arg0[%c0, %c0_0, %c0_1] : memref<8x8x128xbf16, #tpu.memory_space<vmem>>, vector<8x8x128xbf16>
    %1 = vector.shape_cast %0 : vector<8x8x128xbf16> to vector<64x128xbf16>
    %c0_2 = arith.constant 0 : index
    %c0_3 = arith.constant 0 : index
    %2 = vector.load %arg1[%c0_2, %c0_3] : memref<128x512xbf16, #tpu.memory_space<vmem>>, vector<128x512xbf16>
    %cst = arith.constant dense<0.000000e+00> : vector<64x512xf32>
    %3 = tpu.matmul %1, %2, %cst {dimension_numbers = #tpu.dot_dimension_numbers<[1], [0], [0], [1], [0, 0, 1, 1], [], []>} : vector<64x128xbf16>, vector<128x512xbf16>, vector<64x512xf32> -> vector<64x512xf32>
    %c0_4 = arith.constant 0 : index
    %c0_5 = arith.constant 0 : index
    %4 = vector.load %arg3[%c0_4, %c0_5] : memref<1x512xf32, #tpu.memory_space<vmem>>, vector<1x512xf32>
    %5 = vector.broadcast %4 : vector<1x512xf32> to vector<64x512xf32>
    %6 = arith.addf %3, %5 : vector<64x512xf32>
    %7 = vector.shape_cast %6 : vector<64x512xf32> to vector<8x8x512xf32>
    %c0_6 = arith.constant 0 : index
    %c0_7 = arith.constant 0 : index
    %c0_8 = arith.constant 0 : index
    %8 = vector.load %arg5[%c0_6, %c0_7, %c0_8] : memref<8x8x512xf32, #tpu.memory_space<vmem>>, vector<8x8x512xf32>
    tpu.vector_store %arg5[%c0_6, %c0_7, %c0_8], %7 {strides = array<i32>} : memref<8x8x512xf32, #tpu.memory_space<vmem>>, vector<8x8x512xf32>,
    %c0_9 = arith.constant 0 : index
    %c0_10 = arith.constant 0 : index
    %9 = vector.load %arg2[%c0_9, %c0_10] : memref<128x512xbf16, #tpu.memory_space<vmem>>, vector<128x512xbf16>
    %cst_11 = arith.constant 0.000000e+00 : f32
    %10 = vector.broadcast %cst_11 : f32 to vector<8x128xf32>
    %cst_12 = arith.constant 0.000000e+00 : f32
    %11 = vector.broadcast %cst_12 : f32 to vector<8x128xf32>
    %c0_i32 = arith.constant 0 : i32
    %12 = arith.index_cast %c0_i32 : i32 to index
    %c0_13 = arith.constant 0 : index
    %c0_14 = arith.constant 0 : index
    %13 = vector.load %arg5[%12, %c0_13, %c0_14] : memref<8x8x512xf32, #tpu.memory_space<vmem>>, vector<1x8x512xf32>
    %14 = vector.shape_cast %13 : vector<1x8x512xf32> to vector<8x512xf32>
    %15 = arith.truncf %10 : vector<8x128xf32> to vector<8x128xbf16>
    %cst_15 = arith.constant dense<0.000000e+00> : vector<8x512xf32>
    %16 = tpu.matmul %15, %9, %cst_15 {dimension_numbers = #tpu.dot_dimension_numbers<[1], [0], [0], [1], [0, 0, 1, 1], [], []>} : vector<8x128xbf16>, vector<128x512xbf16>, vector<8x512xf32> -> vector<8x512xf32>
    %17 = arith.addf %14, %16 : vector<8x512xf32>
    %18 = vector.extract_strided_slice %17 {offsets = [0, 0], sizes = [8, 384], strides = [1, 1]} : vector<8x512xf32> to vector<8x384xf32>
    %19 = arith.negf %18 : vector<8x384xf32>
    %20 = math.exp %19 : vector<8x384xf32>
    %cst_16 = arith.constant 1.000000e+00 : f32
    %21 = vector.broadcast %cst_16 : f32 to vector<8x384xf32>
    %22 = arith.addf %21, %20 : vector<8x384xf32>
    %23 = arith.divf %21, %22 : vector<8x384xf32>
    %24 = vector.extract_strided_slice %17 {offsets = [0, 384], sizes = [8, 128], strides = [1, 1]} : vector<8x512xf32> to vector<8x128xf32>
    %25 = math.tanh %24 : vector<8x128xf32>
    %26 = vector.extract_strided_slice %23 {offsets = [0, 0], sizes = [8, 128], strides = [1, 1]} : vector<8x384xf32> to vector<8x128xf32>
    %27 = vector.extract_strided_slice %23 {offsets = [0, 128], sizes = [8, 128], strides = [1, 1]} : vector<8x384xf32> to vector<8x128xf32>
    %28 = vector.extract_strided_slice %23 {offsets = [0, 256], sizes = [8, 128], strides = [1, 1]} : vector<8x384xf32> to vector<8x128xf32>
    %29 = arith.mulf %27, %11 : vector<8x128xf32>
    %30 = arith.mulf %26, %25 : vector<8x128xf32>
    %31 = arith.addf %29, %30 : vector<8x128xf32>
    %32 = math.tanh %31 : vector<8x128xf32>
    %33 = arith.mulf %28, %32 : vector<8x128xf32>
    %c1_i32 = arith.constant 1 : i32
    %34 = arith.index_cast %c1_i32 : i32 to index
    %c0_17 = arith.constant 0 : index
    %c0_18 = arith.constant 0 : index
    %35 = vector.load %arg5[%34, %c0_17, %c0_18] : memref<8x8x512xf32, #tpu.memory_space<vmem>>, vector<1x8x512xf32>
    %36 = vector.shape_cast %35 : vector<1x8x512xf32> to vector<8x512xf32>
    %37 = arith.truncf %33 : vector<8x128xf32> to vector<8x128xbf16>
    %cst_19 = arith.constant dense<0.000000e+00> : vector<8x512xf32>
    %38 = tpu.matmul %37, %9, %cst_19 {dimension_numbers = #tpu.dot_dimension_numbers<[1], [0], [0], [1], [0, 0, 1, 1], [], []>} : vector<8x128xbf16>, vector<128x512xbf16>, vector<8x512xf32> -> vector<8x512xf32>
    %39 = arith.addf %36, %38 : vector<8x512xf32>
    %40 = vector.extract_strided_slice %39 {offsets = [0, 0], sizes = [8, 384], strides = [1, 1]} : vector<8x512xf32> to vector<8x384xf32>
    %41 = arith.negf %40 : vector<8x384xf32>
    %42 = math.exp %41 : vector<8x384xf32>
    %cst_20 = arith.constant 1.000000e+00 : f32
    %43 = vector.broadcast %cst_20 : f32 to vector<8x384xf32>
    %44 = arith.addf %43, %42 : vector<8x384xf32>
    %45 = arith.divf %43, %44 : vector<8x384xf32>
    %46 = vector.extract_strided_slice %39 {offsets = [0, 384], sizes = [8, 128], strides = [1, 1]} : vector<8x512xf32> to vector<8x128xf32>
    %47 = math.tanh %46 : vector<8x128xf32>
    %48 = vector.extract_strided_slice %45 {offsets = [0, 0], sizes = [8, 128], strides = [1, 1]} : vector<8x384xf32> to vector<8x128xf32>
    %49 = vector.extract_strided_slice %45 {offsets = [0, 128], sizes = [8, 128], strides = [1, 1]} : vector<8x384xf32> to vector<8x128xf32>
    %50 = vector.extract_strided_slice %45 {offsets = [0, 256], sizes = [8, 128], strides = [1, 1]} : vector<8x384xf32> to vector<8x128xf32>
    %51 = arith.mulf %49, %31 : vector<8x128xf32>
    %52 = arith.mulf %48, %47 : vector<8x128xf32>
    %53 = arith.addf %51, %52 : vector<8x128xf32>
    %54 = math.tanh %53 : vector<8x128xf32>
    %55 = arith.mulf %50, %54 : vector<8x128xf32>
    %c2_i32 = arith.constant 2 : i32
    %56 = arith.index_cast %c2_i32 : i32 to index
    %c0_21 = arith.constant 0 : index
    %c0_22 = arith.constant 0 : index
    %57 = vector.load %arg5[%56, %c0_21, %c0_22] : memref<8x8x512xf32, #tpu.memory_space<vmem>>, vector<1x8x512xf32>
    %58 = vector.shape_cast %57 : vector<1x8x512xf32> to vector<8x512xf32>
    %59 = arith.truncf %55 : vector<8x128xf32> to vector<8x128xbf16>
    %cst_23 = arith.constant dense<0.000000e+00> : vector<8x512xf32>
    %60 = tpu.matmul %59, %9, %cst_23 {dimension_numbers = #tpu.dot_dimension_numbers<[1], [0], [0], [1], [0, 0, 1, 1], [], []>} : vector<8x128xbf16>, vector<128x512xbf16>, vector<8x512xf32> -> vector<8x512xf32>
    %61 = arith.addf %58, %60 : vector<8x512xf32>
    %62 = vector.extract_strided_slice %61 {offsets = [0, 0], sizes = [8, 384], strides = [1, 1]} : vector<8x512xf32> to vector<8x384xf32>
    %63 = arith.negf %62 : vector<8x384xf32>
    %64 = math.exp %63 : vector<8x384xf32>
    %cst_24 = arith.constant 1.000000e+00 : f32
    %65 = vector.broadcast %cst_24 : f32 to vector<8x384xf32>
    %66 = arith.addf %65, %64 : vector<8x384xf32>
    %67 = arith.divf %65, %66 : vector<8x384xf32>
    %68 = vector.extract_strided_slice %61 {offsets = [0, 384], sizes = [8, 128], strides = [1, 1]} : vector<8x512xf32> to vector<8x128xf32>
    %69 = math.tanh %68 : vector<8x128xf32>
    %70 = vector.extract_strided_slice %67 {offsets = [0, 0], sizes = [8, 128], strides = [1, 1]} : vector<8x384xf32> to vector<8x128xf32>
    %71 = vector.extract_strided_slice %67 {offsets = [0, 128], sizes = [8, 128], strides = [1, 1]} : vector<8x384xf32> to vector<8x128xf32>
    %72 = vector.extract_strided_slice %67 {offsets = [0, 256], sizes = [8, 128], strides = [1, 1]} : vector<8x384xf32> to vector<8x128xf32>
    %73 = arith.mulf %71, %53 : vector<8x128xf32>
    %74 = arith.mulf %70, %69 : vector<8x128xf32>
    %75 = arith.addf %73, %74 : vector<8x128xf32>
    %76 = math.tanh %75 : vector<8x128xf32>
    %77 = arith.mulf %72, %76 : vector<8x128xf32>
    %c3_i32 = arith.constant 3 : i32
    %78 = arith.index_cast %c3_i32 : i32 to index
    %c0_25 = arith.constant 0 : index
    %c0_26 = arith.constant 0 : index
    %79 = vector.load %arg5[%78, %c0_25, %c0_26] : memref<8x8x512xf32, #tpu.memory_space<vmem>>, vector<1x8x512xf32>
    %80 = vector.shape_cast %79 : vector<1x8x512xf32> to vector<8x512xf32>
    %81 = arith.truncf %77 : vector<8x128xf32> to vector<8x128xbf16>
    %cst_27 = arith.constant dense<0.000000e+00> : vector<8x512xf32>
    %82 = tpu.matmul %81, %9, %cst_27 {dimension_numbers = #tpu.dot_dimension_numbers<[1], [0], [0], [1], [0, 0, 1, 1], [], []>} : vector<8x128xbf16>, vector<128x512xbf16>, vector<8x512xf32> -> vector<8x512xf32>
    %83 = arith.addf %80, %82 : vector<8x512xf32>
    %84 = vector.extract_strided_slice %83 {offsets = [0, 0], sizes = [8, 384], strides = [1, 1]} : vector<8x512xf32> to vector<8x384xf32>
    %85 = arith.negf %84 : vector<8x384xf32>
    %86 = math.exp %85 : vector<8x384xf32>
    %cst_28 = arith.constant 1.000000e+00 : f32
    %87 = vector.broadcast %cst_28 : f32 to vector<8x384xf32>
    %88 = arith.addf %87, %86 : vector<8x384xf32>
    %89 = arith.divf %87, %88 : vector<8x384xf32>
    %90 = vector.extract_strided_slice %83 {offsets = [0, 384], sizes = [8, 128], strides = [1, 1]} : vector<8x512xf32> to vector<8x128xf32>
    %91 = math.tanh %90 : vector<8x128xf32>
    %92 = vector.extract_strided_slice %89 {offsets = [0, 0], sizes = [8, 128], strides = [1, 1]} : vector<8x384xf32> to vector<8x128xf32>
    %93 = vector.extract_strided_slice %89 {offsets = [0, 128], sizes = [8, 128], strides = [1, 1]} : vector<8x384xf32> to vector<8x128xf32>
    %94 = vector.extract_strided_slice %89 {offsets = [0, 256], sizes = [8, 128], strides = [1, 1]} : vector<8x384xf32> to vector<8x128xf32>
    %95 = arith.mulf %93, %75 : vector<8x128xf32>
    %96 = arith.mulf %92, %91 : vector<8x128xf32>
    %97 = arith.addf %95, %96 : vector<8x128xf32>
    %98 = math.tanh %97 : vector<8x128xf32>
    %99 = arith.mulf %94, %98 : vector<8x128xf32>
    %c4_i32 = arith.constant 4 : i32
    %100 = arith.index_cast %c4_i32 : i32 to index
    %c0_29 = arith.constant 0 : index
    %c0_30 = arith.constant 0 : index
    %101 = vector.load %arg5[%100, %c0_29, %c0_30] : memref<8x8x512xf32, #tpu.memory_space<vmem>>, vector<1x8x512xf32>
    %102 = vector.shape_cast %101 : vector<1x8x512xf32> to vector<8x512xf32>
    %103 = arith.truncf %99 : vector<8x128xf32> to vector<8x128xbf16>
    %cst_31 = arith.constant dense<0.000000e+00> : vector<8x512xf32>
    %104 = tpu.matmul %103, %9, %cst_31 {dimension_numbers = #tpu.dot_dimension_numbers<[1], [0], [0], [1], [0, 0, 1, 1], [], []>} : vector<8x128xbf16>, vector<128x512xbf16>, vector<8x512xf32> -> vector<8x512xf32>
    %105 = arith.addf %102, %104 : vector<8x512xf32>
    %106 = vector.extract_strided_slice %105 {offsets = [0, 0], sizes = [8, 384], strides = [1, 1]} : vector<8x512xf32> to vector<8x384xf32>
    %107 = arith.negf %106 : vector<8x384xf32>
    %108 = math.exp %107 : vector<8x384xf32>
    %cst_32 = arith.constant 1.000000e+00 : f32
    %109 = vector.broadcast %cst_32 : f32 to vector<8x384xf32>
    %110 = arith.addf %109, %108 : vector<8x384xf32>
    %111 = arith.divf %109, %110 : vector<8x384xf32>
    %112 = vector.extract_strided_slice %105 {offsets = [0, 384], sizes = [8, 128], strides = [1, 1]} : vector<8x512xf32> to vector<8x128xf32>
    %113 = math.tanh %112 : vector<8x128xf32>
    %114 = vector.extract_strided_slice %111 {offsets = [0, 0], sizes = [8, 128], strides = [1, 1]} : vector<8x384xf32> to vector<8x128xf32>
    %115 = vector.extract_strided_slice %111 {offsets = [0, 128], sizes = [8, 128], strides = [1, 1]} : vector<8x384xf32> to vector<8x128xf32>
    %116 = vector.extract_strided_slice %111 {offsets = [0, 256], sizes = [8, 128], strides = [1, 1]} : vector<8x384xf32> to vector<8x128xf32>
    %117 = arith.mulf %115, %97 : vector<8x128xf32>
    %118 = arith.mulf %114, %113 : vector<8x128xf32>
    %119 = arith.addf %117, %118 : vector<8x128xf32>
    %120 = math.tanh %119 : vector<8x128xf32>
    %121 = arith.mulf %116, %120 : vector<8x128xf32>
    %c5_i32 = arith.constant 5 : i32
    %122 = arith.index_cast %c5_i32 : i32 to index
    %c0_33 = arith.constant 0 : index
    %c0_34 = arith.constant 0 : index
    %123 = vector.load %arg5[%122, %c0_33, %c0_34] : memref<8x8x512xf32, #tpu.memory_space<vmem>>, vector<1x8x512xf32>
    %124 = vector.shape_cast %123 : vector<1x8x512xf32> to vector<8x512xf32>
    %125 = arith.truncf %121 : vector<8x128xf32> to vector<8x128xbf16>
    %cst_35 = arith.constant dense<0.000000e+00> : vector<8x512xf32>
    %126 = tpu.matmul %125, %9, %cst_35 {dimension_numbers = #tpu.dot_dimension_numbers<[1], [0], [0], [1], [0, 0, 1, 1], [], []>} : vector<8x128xbf16>, vector<128x512xbf16>, vector<8x512xf32> -> vector<8x512xf32>
    %127 = arith.addf %124, %126 : vector<8x512xf32>
    %128 = vector.extract_strided_slice %127 {offsets = [0, 0], sizes = [8, 384], strides = [1, 1]} : vector<8x512xf32> to vector<8x384xf32>
    %129 = arith.negf %128 : vector<8x384xf32>
    %130 = math.exp %129 : vector<8x384xf32>
    %cst_36 = arith.constant 1.000000e+00 : f32
    %131 = vector.broadcast %cst_36 : f32 to vector<8x384xf32>
    %132 = arith.addf %131, %130 : vector<8x384xf32>
    %133 = arith.divf %131, %132 : vector<8x384xf32>
    %134 = vector.extract_strided_slice %127 {offsets = [0, 384], sizes = [8, 128], strides = [1, 1]} : vector<8x512xf32> to vector<8x128xf32>
    %135 = math.tanh %134 : vector<8x128xf32>
    %136 = vector.extract_strided_slice %133 {offsets = [0, 0], sizes = [8, 128], strides = [1, 1]} : vector<8x384xf32> to vector<8x128xf32>
    %137 = vector.extract_strided_slice %133 {offsets = [0, 128], sizes = [8, 128], strides = [1, 1]} : vector<8x384xf32> to vector<8x128xf32>
    %138 = vector.extract_strided_slice %133 {offsets = [0, 256], sizes = [8, 128], strides = [1, 1]} : vector<8x384xf32> to vector<8x128xf32>
    %139 = arith.mulf %137, %119 : vector<8x128xf32>
    %140 = arith.mulf %136, %135 : vector<8x128xf32>
    %141 = arith.addf %139, %140 : vector<8x128xf32>
    %142 = math.tanh %141 : vector<8x128xf32>
    %143 = arith.mulf %138, %142 : vector<8x128xf32>
    %c6_i32 = arith.constant 6 : i32
    %144 = arith.index_cast %c6_i32 : i32 to index
    %c0_37 = arith.constant 0 : index
    %c0_38 = arith.constant 0 : index
    %145 = vector.load %arg5[%144, %c0_37, %c0_38] : memref<8x8x512xf32, #tpu.memory_space<vmem>>, vector<1x8x512xf32>
    %146 = vector.shape_cast %145 : vector<1x8x512xf32> to vector<8x512xf32>
    %147 = arith.truncf %143 : vector<8x128xf32> to vector<8x128xbf16>
    %cst_39 = arith.constant dense<0.000000e+00> : vector<8x512xf32>
    %148 = tpu.matmul %147, %9, %cst_39 {dimension_numbers = #tpu.dot_dimension_numbers<[1], [0], [0], [1], [0, 0, 1, 1], [], []>} : vector<8x128xbf16>, vector<128x512xbf16>, vector<8x512xf32> -> vector<8x512xf32>
    %149 = arith.addf %146, %148 : vector<8x512xf32>
    %150 = vector.extract_strided_slice %149 {offsets = [0, 0], sizes = [8, 384], strides = [1, 1]} : vector<8x512xf32> to vector<8x384xf32>
    %151 = arith.negf %150 : vector<8x384xf32>
    %152 = math.exp %151 : vector<8x384xf32>
    %cst_40 = arith.constant 1.000000e+00 : f32
    %153 = vector.broadcast %cst_40 : f32 to vector<8x384xf32>
    %154 = arith.addf %153, %152 : vector<8x384xf32>
    %155 = arith.divf %153, %154 : vector<8x384xf32>
    %156 = vector.extract_strided_slice %149 {offsets = [0, 384], sizes = [8, 128], strides = [1, 1]} : vector<8x512xf32> to vector<8x128xf32>
    %157 = math.tanh %156 : vector<8x128xf32>
    %158 = vector.extract_strided_slice %155 {offsets = [0, 0], sizes = [8, 128], strides = [1, 1]} : vector<8x384xf32> to vector<8x128xf32>
    %159 = vector.extract_strided_slice %155 {offsets = [0, 128], sizes = [8, 128], strides = [1, 1]} : vector<8x384xf32> to vector<8x128xf32>
    %160 = vector.extract_strided_slice %155 {offsets = [0, 256], sizes = [8, 128], strides = [1, 1]} : vector<8x384xf32> to vector<8x128xf32>
    %161 = arith.mulf %159, %141 : vector<8x128xf32>
    %162 = arith.mulf %158, %157 : vector<8x128xf32>
    %163 = arith.addf %161, %162 : vector<8x128xf32>
    %164 = math.tanh %163 : vector<8x128xf32>
    %165 = arith.mulf %160, %164 : vector<8x128xf32>
    %c7_i32 = arith.constant 7 : i32
    %166 = arith.index_cast %c7_i32 : i32 to index
    %c0_41 = arith.constant 0 : index
    %c0_42 = arith.constant 0 : index
    %167 = vector.load %arg5[%166, %c0_41, %c0_42] : memref<8x8x512xf32, #tpu.memory_space<vmem>>, vector<1x8x512xf32>
    %168 = vector.shape_cast %167 : vector<1x8x512xf32> to vector<8x512xf32>
    %169 = arith.truncf %165 : vector<8x128xf32> to vector<8x128xbf16>
    %cst_43 = arith.constant dense<0.000000e+00> : vector<8x512xf32>
    %170 = tpu.matmul %169, %9, %cst_43 {dimension_numbers = #tpu.dot_dimension_numbers<[1], [0], [0], [1], [0, 0, 1, 1], [], []>} : vector<8x128xbf16>, vector<128x512xbf16>, vector<8x512xf32> -> vector<8x512xf32>
    %171 = arith.addf %168, %170 : vector<8x512xf32>
    %172 = vector.extract_strided_slice %171 {offsets = [0, 0], sizes = [8, 384], strides = [1, 1]} : vector<8x512xf32> to vector<8x384xf32>
    %173 = arith.negf %172 : vector<8x384xf32>
    %174 = math.exp %173 : vector<8x384xf32>
    %cst_44 = arith.constant 1.000000e+00 : f32
    %175 = vector.broadcast %cst_44 : f32 to vector<8x384xf32>
    %176 = arith.addf %175, %174 : vector<8x384xf32>
    %177 = arith.divf %175, %176 : vector<8x384xf32>
    %178 = vector.extract_strided_slice %171 {offsets = [0, 384], sizes = [8, 128], strides = [1, 1]} : vector<8x512xf32> to vector<8x128xf32>
    %179 = math.tanh %178 : vector<8x128xf32>
    %180 = vector.extract_strided_slice %177 {offsets = [0, 0], sizes = [8, 128], strides = [1, 1]} : vector<8x384xf32> to vector<8x128xf32>
    %181 = vector.extract_strided_slice %177 {offsets = [0, 128], sizes = [8, 128], strides = [1, 1]} : vector<8x384xf32> to vector<8x128xf32>
    %182 = vector.extract_strided_slice %177 {offsets = [0, 256], sizes = [8, 128], strides = [1, 1]} : vector<8x384xf32> to vector<8x128xf32>
    %183 = arith.mulf %181, %163 : vector<8x128xf32>
    %184 = arith.mulf %180, %179 : vector<8x128xf32>
    %185 = arith.addf %183, %184 : vector<8x128xf32>
    %186 = math.tanh %185 : vector<8x128xf32>
    %187 = arith.mulf %182, %186 : vector<8x128xf32>
    %c8_i32 = arith.constant 8 : i32
    %188 = arith.truncf %187 : vector<8x128xf32> to vector<8x128xbf16>
    %c0_45 = arith.constant 0 : index
    %c0_46 = arith.constant 0 : index
    %189 = vector.load %arg4[%c0_45, %c0_46] : memref<8x128xbf16, #tpu.memory_space<vmem>>, vector<8x128xbf16>
    tpu.vector_store %arg4[%c0_45, %c0_46], %188 {strides = array<i32>} : memref<8x128xbf16, #tpu.memory_space<vmem>>, vector<8x128xbf16>,
    return
  }
}

</mosaic_0001>

<llo_original>
// kernel: tpu_custom_call.1
$region0: #{tpu_custom_call.1}
  #allocation0 [shape = 'u32[]', space=smem, size = 0x4, offset = 0x4, fixed_abs, tag = 'smem constant byte address 0x4 - core index']
  #allocation1 [shape = 'u32[72,128]{1,0:T(1,128)}', space=vmem, size = 0x9000, scoped, tag = 'internal scratch']
  #allocation2 [shape = 'f32[8,8,512]{2,1,0:T(8,128)}', space=vmem, size = 0x20000, scoped, tag = 'scratch operand']
  %s0 = inlined_call_operand.hbm [shape: bf16[8,8,128], index: 0, kind: input, shape index: {}]
  %s1 = inlined_call_operand.hbm [shape: bf16[128,512], index: 1, kind: input, shape index: {}]
  %s2 = inlined_call_operand.hbm [shape: bf16[128,512], index: 2, kind: input, shape index: {}]
  %s3 = inlined_call_operand.hbm [shape: f32[1,512], index: 3, kind: input, shape index: {}]
  %s4 = inlined_call_operand.hbm [shape: bf16[8,128], index: 4, kind: output, shape index: {}]
  %s5 = sld [smem:[#allocation0]]
  $region42: #{tpu_custom_call.1} parent=0
    _
  %s7 = ssub.s32 1, %s5
  %s8 = scalar_select 0, %s7, %s5
  $region1: #{tpu_custom_call.1} parent=0
    #allocation3 [shape = 'u8[16384]{0}', space=vmem, size = 0x4000, scoped, tag = 'input window, operand 0, single buffered']
    #allocation4 [shape = 's32[1]{0}', space=sflag, size = 0x4, scoped, tag = 'scoped memory for tpu_custom_call.1']
    #allocation5 [shape = 's32[1]{0}', space=sflag, size = 0x4, scoped, tag = 'scoped memory for tpu_custom_call.1']
    #allocation6 [shape = 'u8[131072]{0}', space=vmem, size = 0x20000, scoped, tag = 'input window, operand 1, single buffered']
    #allocation7 [shape = 's32[1]{0}', space=sflag, size = 0x4, scoped, tag = 'scoped memory for tpu_custom_call.1']
    #allocation8 [shape = 'u8[131072]{0}', space=vmem, size = 0x20000, scoped, tag = 'input window, operand 2, single buffered']
    #allocation9 [shape = 'u8[2048]{0}', space=vmem, size = 0x800, scoped, tag = 'input window, operand 3, single buffered']
    #allocation10 [shape = 's32[1]{0}', space=sflag, size = 0x4, scoped, tag = 'scoped memory for tpu_custom_call.1']
    #allocation11 [shape = 'u8[2048]{0}', space=vmem, size = 0x800, scoped, tag = 'output window, operand 0, single buffered']
    %9 = vsyncpa [#allocation4], 0
    %10 = vsyncpa [#allocation7], 0
    %11 = vsyncpa [#allocation10], 0
    %12 = vsyncpa [#allocation5], 0
    // Predicated region
    $region2: #{tpu_custom_call.1} parent=1 // pred_check
      _
    $region3: #{tpu_custom_call.1} parent=1 // pred_check_branch
      %14 = sbr.rel (0) target = $region5
    $region4: #{tpu_custom_call.1} parent=1 // pred_region
      %16 = vsyncadd [#allocation4], 0
      %s17 = sshll.u32 %s0, 4
      %s18 = int_to_ptr.hbm [resolvable:$true] %s17
      %s19 = sshll.u32 [#allocation3], 4
      %s20 = int_to_ptr.vmem [resolvable:$true] %s19
      %25 = dma.hbm_to_vmem [thread:$0]  %s18, 512, %s20, [#allocation4], 64, 64, 4
    $region5: #{tpu_custom_call.1} parent=1 // pred_fallthru
      _
    // Predicated region
    $region6: #{tpu_custom_call.1} parent=1 // pred_check
      _
    $region7: #{tpu_custom_call.1} parent=1 // pred_check_branch
      %27 = sbr.rel (0) target = $region9
    $region8: #{tpu_custom_call.1} parent=1 // pred_region
      %29 = vsyncadd [#allocation7], 0
      %s30 = sshll.u32 %s1, 4
      %s31 = int_to_ptr.hbm [resolvable:$true] %s30
      %s32 = sshll.u32 [#allocation6], 4
      %s33 = int_to_ptr.vmem [resolvable:$true] %s32
      %38 = dma.hbm_to_vmem [thread:$0]  %s31, 4096, %s33, [#allocation7], 256, 256, 16
    $region9: #{tpu_custom_call.1} parent=1 // pred_fallthru
      _
    // Predicated region
    $region10: #{tpu_custom_call.1} parent=1 // pred_check
      _
    $region11: #{tpu_custom_call.1} parent=1 // pred_check_branch
      %40 = sbr.rel (0) target = $region13
    $region12: #{tpu_custom_call.1} parent=1 // pred_region
      %42 = vsyncadd [#allocation7], 0
      %s43 = sshll.u32 %s2, 4
      %s44 = int_to_ptr.hbm [resolvable:$true] %s43
      %s45 = sshll.u32 [#allocation8], 4
      %s46 = int_to_ptr.vmem [resolvable:$true] %s45
      %51 = dma.hbm_to_vmem [thread:$0]  %s44, 4096, %s46, [#allocation7], 256, 256, 16
    $region13: #{tpu_custom_call.1} parent=1 // pred_fallthru
      _
    // Predicated region
    $region14: #{tpu_custom_call.1} parent=1 // pred_check
      _
    $region15: #{tpu_custom_call.1} parent=1 // pred_check_branch
      %53 = sbr.rel (0) target = $region17
    $region16: #{tpu_custom_call.1} parent=1 // pred_region
      %55 = vsyncadd [#allocation10], 0
      %s57 = sshll.u32 %s3, 4
      %s58 = int_to_ptr.hbm [resolvable:$true] %s57
      %s59 = sshll.u32 [#allocation9], 4
      %s60 = int_to_ptr.vmem [resolvable:$true] %s59
      %62 = dma.hbm_to_vmem [thread:$0]  %s58, 64, %s60, [#allocation10]
    $region17: #{tpu_custom_call.1} parent=1 // pred_fallthru
      _
    // Predicated region
    $region18: #{tpu_custom_call.1} parent=1 // pred_check
      _
    $region19: #{tpu_custom_call.1} parent=1 // pred_check_branch
      %64 = sbr.rel (0) target = $region21
    $region20: #{tpu_custom_call.1} parent=1 // pred_region
      %66 = dma.done [#allocation4], 512
    $region21: #{tpu_custom_call.1} parent=1 // pred_fallthru
      _
    // Predicated region
    $region22: #{tpu_custom_call.1} parent=1 // pred_check
      _
    $region23: #{tpu_custom_call.1} parent=1 // pred_check_branch
      %68 = sbr.rel (0) target = $region25
    $region24: #{tpu_custom_call.1} parent=1 // pred_region
      %70 = dma.done [#allocation7], 4096
    $region25: #{tpu_custom_call.1} parent=1 // pred_fallthru
      _
    // Predicated region
    $region26: #{tpu_custom_call.1} parent=1 // pred_check
      _
    $region27: #{tpu_custom_call.1} parent=1 // pred_check_branch
      %72 = sbr.rel (0) target = $region29
    $region28: #{tpu_custom_call.1} parent=1 // pred_region
      %74 = dma.done [#allocation7], 4096
    $region29: #{tpu_custom_call.1} parent=1 // pred_fallthru
      _
    // Predicated region
    $region30: #{tpu_custom_call.1} parent=1 // pred_check
      _
    $region31: #{tpu_custom_call.1} parent=1 // pred_check_branch
      %76 = sbr.rel (0) target = $region33
    $region32: #{tpu_custom_call.1} parent=1 // pred_region
      %78 = dma.done [#allocation10], 64
    $region33: #{tpu_custom_call.1} parent=1 // pred_fallthru
      _
    %v80 = vld [vmem:[#allocation3] sm:$0xf]
    %v81 = vld [vmem:[#allocation3 + $0x4] sm:$0xf]
    %v82 = vld [vmem:[#allocation3 + $0x8] sm:$0xf]
    %v83 = vld [vmem:[#allocation3 + $0xc] sm:$0xf]
    %v84 = vld [vmem:[#allocation3 + $0x10] sm:$0xf]
    %v85 = vld [vmem:[#allocation3 + $0x14] sm:$0xf]
    %v86 = vld [vmem:[#allocation3 + $0x18] sm:$0xf]
    %v87 = vld [vmem:[#allocation3 + $0x1c] sm:$0xf]
    %v88 = vld [vmem:[#allocation6] sm:$0xff]
    %v89 = vld [vmem:[#allocation6 + $0x8] sm:$0xff]
    %v90 = vld [vmem:[#allocation6 + $0x10] sm:$0xff]
    %v91 = vld [vmem:[#allocation6 + $0x18] sm:$0xff]
    %v92 = vld [vmem:[#allocation6 + $0x20] sm:$0xff]
    %v93 = vld [vmem:[#allocation6 + $0x28] sm:$0xff]
    %v94 = vld [vmem:[#allocation6 + $0x30] sm:$0xff]
    %v95 = vld [vmem:[#allocation6 + $0x38] sm:$0xff]
    %v96 = vld [vmem:[#allocation6 + $0x40] sm:$0xff]
    %v97 = vld [vmem:[#allocation6 + $0x48] sm:$0xff]
    %v98 = vld [vmem:[#allocation6 + $0x50] sm:$0xff]
    %v99 = vld [vmem:[#allocation6 + $0x58] sm:$0xff]
    %v100 = vld [vmem:[#allocation6 + $0x60] sm:$0xff]
    %v101 = vld [vmem:[#allocation6 + $0x68] sm:$0xff]
    %v102 = vld [vmem:[#allocation6 + $0x70] sm:$0xff]
    %v103 = vld [vmem:[#allocation6 + $0x78] sm:$0xff]
    %v104 = vld [vmem:[#allocation6 + $0x80] sm:$0xff]
    %v105 = vld [vmem:[#allocation6 + $0x88] sm:$0xff]
    %v106 = vld [vmem:[#allocation6 + $0x90] sm:$0xff]
    %v107 = vld [vmem:[#allocation6 + $0x98] sm:$0xff]
    %v108 = vld [vmem:[#allocation6 + $0xa0] sm:$0xff]
    %v109 = vld [vmem:[#allocation6 + $0xa8] sm:$0xff]
    %v110 = vld [vmem:[#allocation6 + $0xb0] sm:$0xff]
    %v111 = vld [vmem:[#allocation6 + $0xb8] sm:$0xff]
    %v112 = vld [vmem:[#allocation6 + $0xc0] sm:$0xff]
    %v113 = vld [vmem:[#allocation6 + $0xc8] sm:$0xff]
    %v114 = vld [vmem:[#allocation6 + $0xd0] sm:$0xff]
    %v115 = vld [vmem:[#allocation6 + $0xd8] sm:$0xff]
    %v116 = vld [vmem:[#allocation6 + $0xe0] sm:$0xff]
    %v117 = vld [vmem:[#allocation6 + $0xe8] sm:$0xff]
    %v118 = vld [vmem:[#allocation6 + $0xf0] sm:$0xff]
    %v119 = vld [vmem:[#allocation6 + $0xf8] sm:$0xff]
    %v120 = vld [vmem:[#allocation9] sm:$0xf]
    %v122 = vperm.slane %v120, 0
    %v123 = vperm.slane %v120, 1
    %v124 = vperm.slane %v120, 2
    %v125 = vperm.slane %v120, 3
    %v138 = vunpack.c.l.b16 %v80
    %v139 = vunpack.c.l.b16 %v81
    %v140 = vunpack.c.l.b16 %v82
    %v141 = vunpack.c.l.b16 %v83
    %v142 = vunpack.c.l.b16 %v84
    %v143 = vunpack.c.l.b16 %v85
    %v144 = vunpack.c.l.b16 %v86
    %v145 = vunpack.c.l.b16 %v87
    %v146 = vpack.c.b16 %v139, %v138
    %v147 = vpack.c.b16 %v141, %v140
    %v148 = vpack.c.b16 %v143, %v142
    %v149 = vpack.c.b16 %v145, %v144
    %v186 = vunpack.c.l.b16 %v88
    %v187 = vunpack.c.h.b16 %v88
    %v188 = vunpack.c.l.b16 %v89
    %v189 = vunpack.c.h.b16 %v89
    %v190 = vunpack.c.l.b16 %v90
    %v191 = vunpack.c.h.b16 %v90
    %v192 = vunpack.c.l.b16 %v91
    %v193 = vunpack.c.h.b16 %v91
    %v194 = vunpack.c.l.b16 %v92
    %v195 = vunpack.c.h.b16 %v92
    %v196 = vunpack.c.l.b16 %v93
    %v197 = vunpack.c.h.b16 %v93
    %v198 = vunpack.c.l.b16 %v94
    %v199 = vunpack.c.h.b16 %v94
    %v200 = vunpack.c.l.b16 %v95
    %v201 = vunpack.c.h.b16 %v95
    %v202 = vunpack.c.l.b16 %v96
    %v203 = vunpack.c.h.b16 %v96
    %v204 = vunpack.c.l.b16 %v97
    %v205 = vunpack.c.h.b16 %v97
    %v206 = vunpack.c.l.b16 %v98
    %v207 = vunpack.c.h.b16 %v98
    %v208 = vunpack.c.l.b16 %v99
    %v209 = vunpack.c.h.b16 %v99
    %v210 = vunpack.c.l.b16 %v100
    %v211 = vunpack.c.h.b16 %v100
    %v212 = vunpack.c.l.b16 %v101
    %v213 = vunpack.c.h.b16 %v101
    %v214 = vunpack.c.l.b16 %v102
    %v215 = vunpack.c.h.b16 %v102
    %v216 = vunpack.c.l.b16 %v103
    %v217 = vunpack.c.h.b16 %v103
    %v218 = vunpack.c.l.b16 %v104
    %v219 = vunpack.c.h.b16 %v104
    %v220 = vunpack.c.l.b16 %v105
    %v221 = vunpack.c.h.b16 %v105
    %v222 = vunpack.c.l.b16 %v106
    %v223 = vunpack.c.h.b16 %v106
    %v224 = vunpack.c.l.b16 %v107
    %v225 = vunpack.c.h.b16 %v107
    %v226 = vunpack.c.l.b16 %v108
    %v227 = vunpack.c.h.b16 %v108
    %v228 = vunpack.c.l.b16 %v109
    %v229 = vunpack.c.h.b16 %v109
    %v230 = vunpack.c.l.b16 %v110
    %v231 = vunpack.c.h.b16 %v110
    %v232 = vunpack.c.l.b16 %v111
    %v233 = vunpack.c.h.b16 %v111
    %v234 = vunpack.c.l.b16 %v112
    %v235 = vunpack.c.h.b16 %v112
    %v236 = vunpack.c.l.b16 %v113
    %v237 = vunpack.c.h.b16 %v113
    %v238 = vunpack.c.l.b16 %v114
    %v239 = vunpack.c.h.b16 %v114
    %v240 = vunpack.c.l.b16 %v115
    %v241 = vunpack.c.h.b16 %v115
    %v242 = vunpack.c.l.b16 %v116
    %v243 = vunpack.c.h.b16 %v116
    %v244 = vunpack.c.l.b16 %v117
    %v245 = vunpack.c.h.b16 %v117
    %v246 = vunpack.c.l.b16 %v118
    %v247 = vunpack.c.h.b16 %v118
    %v248 = vunpack.c.l.b16 %v119
    %v249 = vunpack.c.h.b16 %v119
    %v250 = vpack.c.b16 %v190, %v186
    %v251 = vpack.c.b16 %v191, %v187
    %v252 = vpack.c.b16 %v192, %v188
    %v253 = vpack.c.b16 %v193, %v189
    %v254 = vpack.c.b16 %v198, %v194
    %v255 = vpack.c.b16 %v199, %v195
    %v256 = vpack.c.b16 %v200, %v196
    %v257 = vpack.c.b16 %v201, %v197
    %v258 = vpack.c.b16 %v206, %v202
    %v259 = vpack.c.b16 %v207, %v203
    %v260 = vpack.c.b16 %v208, %v204
    %v261 = vpack.c.b16 %v209, %v205
    %v262 = vpack.c.b16 %v214, %v210
    %v263 = vpack.c.b16 %v215, %v211
    %v264 = vpack.c.b16 %v216, %v212
    %v265 = vpack.c.b16 %v217, %v213
    %v266 = vpack.c.b16 %v222, %v218
    %v267 = vpack.c.b16 %v223, %v219
    %v268 = vpack.c.b16 %v224, %v220
    %v269 = vpack.c.b16 %v225, %v221
    %v270 = vpack.c.b16 %v230, %v226
    %v271 = vpack.c.b16 %v231, %v227
    %v272 = vpack.c.b16 %v232, %v228
    %v273 = vpack.c.b16 %v233, %v229
    %v274 = vpack.c.b16 %v238, %v234
    %v275 = vpack.c.b16 %v239, %v235
    %v276 = vpack.c.b16 %v240, %v236
    %v277 = vpack.c.b16 %v241, %v237
    %v278 = vpack.c.b16 %v246, %v242
    %v279 = vpack.c.b16 %v247, %v243
    %v280 = vpack.c.b16 %v248, %v244
    %v281 = vpack.c.b16 %v249, %v245
    %314 = vmatpush.bf16.msra.mxu0 %v278
    %315 = vmatpush.bf16.msra.mxu0 %v274
    %316 = vmatpush.bf16.msra.mxu0 %v270
    %317 = vmatpush.bf16.msra.mxu0 %v266
    %318 = vmatpush.bf16.msra.mxu0 %v262
    %319 = vmatpush.bf16.msra.mxu0 %v258
    %320 = vmatpush.bf16.msra.mxu0 %v254
    %321 = vmatpush.bf16.msra.mxu0 %v250
    %322 = vmatmul.bf16.gmra.mxu0 %v146
    %v323 = vpop.f32.mrf.mxu0
    %v324 = vadd.f32 %v122, %v323
    %v325 = vpop.f32.mrf.mxu0
    %v326 = vadd.f32 %v122, %v325
    %327 = vmatmul.bf16.gmra.mxu0 %v147
    %v328 = vpop.f32.mrf.mxu0
    %v329 = vadd.f32 %v122, %v328
    %v330 = vpop.f32.mrf.mxu0
    %v331 = vadd.f32 %v122, %v330
    %332 = vmatmul.bf16.gmra.mxu0 %v148
    %v333 = vpop.f32.mrf.mxu0
    %v334 = vadd.f32 %v122, %v333
    %v335 = vpop.f32.mrf.mxu0
    %v336 = vadd.f32 %v122, %v335
    %337 = vmatmul.bf16.gmra.mxu0 %v149
    %v338 = vpop.f32.mrf.mxu0
    %v339 = vadd.f32 %v122, %v338
    %v340 = vpop.f32.mrf.mxu0
    %v341 = vadd.f32 %v122, %v340
    %342 = vdwg.mxu0
    %343 = vmatpush.bf16.msra.mxu0 %v279
    %344 = vmatpush.bf16.msra.mxu0 %v275
    %345 = vmatpush.bf16.msra.mxu0 %v271
    %346 = vmatpush.bf16.msra.mxu0 %v267
    %347 = vmatpush.bf16.msra.mxu0 %v263
    %348 = vmatpush.bf16.msra.mxu0 %v259
    %349 = vmatpush.bf16.msra.mxu0 %v255
    %350 = vmatpush.bf16.msra.mxu0 %v251
    %351 = vmatmul.bf16.gmra.mxu0 %v146
    %v352 = vpop.f32.mrf.mxu0
    %v353 = vadd.f32 %v123, %v352
    %v354 = vpop.f32.mrf.mxu0
    %v355 = vadd.f32 %v123, %v354
    %356 = vmatmul.bf16.gmra.mxu0 %v147
    %v357 = vpop.f32.mrf.mxu0
    %v358 = vadd.f32 %v123, %v357
    %v359 = vpop.f32.mrf.mxu0
    %v360 = vadd.f32 %v123, %v359
    %361 = vmatmul.bf16.gmra.mxu0 %v148
    %v362 = vpop.f32.mrf.mxu0
    %v363 = vadd.f32 %v123, %v362
    %v364 = vpop.f32.mrf.mxu0
    %v365 = vadd.f32 %v123, %v364
    %366 = vmatmul.bf16.gmra.mxu0 %v149
    %v367 = vpop.f32.mrf.mxu0
    %v368 = vadd.f32 %v123, %v367
    %v369 = vpop.f32.mrf.mxu0
    %v370 = vadd.f32 %v123, %v369
    %371 = vdwg.mxu0
    %372 = vmatpush.bf16.msra.mxu0 %v280
    %373 = vmatpush.bf16.msra.mxu0 %v276
    %374 = vmatpush.bf16.msra.mxu0 %v272
    %375 = vmatpush.bf16.msra.mxu0 %v268
    %376 = vmatpush.bf16.msra.mxu0 %v264
    %377 = vmatpush.bf16.msra.mxu0 %v260
    %378 = vmatpush.bf16.msra.mxu0 %v256
    %379 = vmatpush.bf16.msra.mxu0 %v252
    %380 = vmatmul.bf16.gmra.mxu0 %v146
    %v381 = vpop.f32.mrf.mxu0
    %v382 = vadd.f32 %v124, %v381
    %v383 = vpop.f32.mrf.mxu0
    %v384 = vadd.f32 %v124, %v383
    %385 = vmatmul.bf16.gmra.mxu0 %v147
    %v386 = vpop.f32.mrf.mxu0
    %v387 = vadd.f32 %v124, %v386
    %v388 = vpop.f32.mrf.mxu0
    %v389 = vadd.f32 %v124, %v388
    %390 = vmatmul.bf16.gmra.mxu0 %v148
    %v391 = vpop.f32.mrf.mxu0
    %v392 = vadd.f32 %v124, %v391
    %v393 = vpop.f32.mrf.mxu0
    %v394 = vadd.f32 %v124, %v393
    %395 = vmatmul.bf16.gmra.mxu0 %v149
    %v396 = vpop.f32.mrf.mxu0
    %v397 = vadd.f32 %v124, %v396
    %v398 = vpop.f32.mrf.mxu0
    %v399 = vadd.f32 %v124, %v398
    %400 = vdwg.mxu0
    %401 = vmatpush.bf16.msra.mxu0 %v281
    %402 = vmatpush.bf16.msra.mxu0 %v277
    %403 = vmatpush.bf16.msra.mxu0 %v273
    %404 = vmatpush.bf16.msra.mxu0 %v269
    %405 = vmatpush.bf16.msra.mxu0 %v265
    %406 = vmatpush.bf16.msra.mxu0 %v261
    %407 = vmatpush.bf16.msra.mxu0 %v257
    %408 = vmatpush.bf16.msra.mxu0 %v253
    %409 = vmatmul.bf16.gmra.mxu0 %v146
    %v410 = vpop.f32.mrf.mxu0
    %v411 = vadd.f32 %v125, %v410
    %v412 = vpop.f32.mrf.mxu0
    %v413 = vadd.f32 %v125, %v412
    %414 = vmatmul.bf16.gmra.mxu0 %v147
    %v415 = vpop.f32.mrf.mxu0
    %v416 = vadd.f32 %v125, %v415
    %v417 = vpop.f32.mrf.mxu0
    %v418 = vadd.f32 %v125, %v417
    %419 = vmatmul.bf16.gmra.mxu0 %v148
    %v420 = vpop.f32.mrf.mxu0
    %v421 = vadd.f32 %v125, %v420
    %v422 = vpop.f32.mrf.mxu0
    %v423 = vadd.f32 %v125, %v422
    %424 = vmatmul.bf16.gmra.mxu0 %v149
    %v425 = vpop.f32.mrf.mxu0
    %v426 = vadd.f32 %v125, %v425
    %v427 = vpop.f32.mrf.mxu0
    %v428 = vadd.f32 %v125, %v427
    %429 = vdwg.mxu0
    %430 = vst [vmem:[#allocation2] sm:$0xff] %v324
    %431 = vst [vmem:[#allocation2 + $0x8] sm:$0xff] %v353
    %432 = vst [vmem:[#allocation2 + $0x10] sm:$0xff] %v382
    %433 = vst [vmem:[#allocation2 + $0x18] sm:$0xff] %v411
    %434 = vst [vmem:[#allocation2 + $0x20] sm:$0xff] %v326
    %435 = vst [vmem:[#allocation2 + $0x28] sm:$0xff] %v355
    %436 = vst [vmem:[#allocation2 + $0x30] sm:$0xff] %v384
    %437 = vst [vmem:[#allocation2 + $0x38] sm:$0xff] %v413
    %438 = vst [vmem:[#allocation2 + $0x40] sm:$0xff] %v329
    %439 = vst [vmem:[#allocation2 + $0x48] sm:$0xff] %v358
    %440 = vst [vmem:[#allocation2 + $0x50] sm:$0xff] %v387
    %441 = vst [vmem:[#allocation2 + $0x58] sm:$0xff] %v416
    %442 = vst [vmem:[#allocation2 + $0x60] sm:$0xff] %v331
    %443 = vst [vmem:[#allocation2 + $0x68] sm:$0xff] %v360
    %444 = vst [vmem:[#allocation2 + $0x70] sm:$0xff] %v389
    %445 = vst [vmem:[#allocation2 + $0x78] sm:$0xff] %v418
    %446 = vst [vmem:[#allocation2 + $0x80] sm:$0xff] %v334
    %447 = vst [vmem:[#allocation2 + $0x88] sm:$0xff] %v363
    %448 = vst [vmem:[#allocation2 + $0x90] sm:$0xff] %v392
    %449 = vst [vmem:[#allocation2 + $0x98] sm:$0xff] %v421
    %450 = vst [vmem:[#allocation2 + $0xa0] sm:$0xff] %v336
    %451 = vst [vmem:[#allocation2 + $0xa8] sm:$0xff] %v365
    %452 = vst [vmem:[#allocation2 + $0xb0] sm:$0xff] %v394
    %453 = vst [vmem:[#allocation2 + $0xb8] sm:$0xff] %v423
    %454 = vst [vmem:[#allocation2 + $0xc0] sm:$0xff] %v339
    %455 = vst [vmem:[#allocation2 + $0xc8] sm:$0xff] %v368
    %456 = vst [vmem:[#allocation2 + $0xd0] sm:$0xff] %v397
    %457 = vst [vmem:[#allocation2 + $0xd8] sm:$0xff] %v426
    %458 = vst [vmem:[#allocation2 + $0xe0] sm:$0xff] %v341
    %459 = vst [vmem:[#allocation2 + $0xe8] sm:$0xff] %v370
    %460 = vst [vmem:[#allocation2 + $0xf0] sm:$0xff] %v399
    %461 = vst [vmem:[#allocation2 + $0xf8] sm:$0xff] %v428
    %v462 = vld [vmem:[#allocation8] sm:$0xff]
    %v463 = vld [vmem:[#allocation8 + $0x8] sm:$0xff]
    %v464 = vld [vmem:[#allocation8 + $0x10] sm:$0xff]
    %v465 = vld [vmem:[#allocation8 + $0x18] sm:$0xff]
    %v466 = vld [vmem:[#allocation8 + $0x20] sm:$0xff]
    %v467 = vld [vmem:[#allocation8 + $0x28] sm:$0xff]
    %v468 = vld [vmem:[#allocation8 + $0x30] sm:$0xff]
    %v469 = vld [vmem:[#allocation8 + $0x38] sm:$0xff]
    %v470 = vld [vmem:[#allocation8 + $0x40] sm:$0xff]
    %v471 = vld [vmem:[#allocation8 + $0x48] sm:$0xff]
    %v472 = vld [vmem:[#allocation8 + $0x50] sm:$0xff]
    %v473 = vld [vmem:[#allocation8 + $0x58] sm:$0xff]
    %v474 = vld [vmem:[#allocation8 + $0x60] sm:$0xff]
    %v475 = vld [vmem:[#allocation8 + $0x68] sm:$0xff]
    %v476 = vld [vmem:[#allocation8 + $0x70] sm:$0xff]
    %v477 = vld [vmem:[#allocation8 + $0x78] sm:$0xff]
    %v478 = vld [vmem:[#allocation8 + $0x80] sm:$0xff]
    %v479 = vld [vmem:[#allocation8 + $0x88] sm:$0xff]
    %v480 = vld [vmem:[#allocation8 + $0x90] sm:$0xff]
    %v481 = vld [vmem:[#allocation8 + $0x98] sm:$0xff]
    %v482 = vld [vmem:[#allocation8 + $0xa0] sm:$0xff]
    %v483 = vld [vmem:[#allocation8 + $0xa8] sm:$0xff]
    %v484 = vld [vmem:[#allocation8 + $0xb0] sm:$0xff]
    %v485 = vld [vmem:[#allocation8 + $0xb8] sm:$0xff]
    %v486 = vld [vmem:[#allocation8 + $0xc0] sm:$0xff]
    %v487 = vld [vmem:[#allocation8 + $0xc8] sm:$0xff]
    %v488 = vld [vmem:[#allocation8 + $0xd0] sm:$0xff]
    %v489 = vld [vmem:[#allocation8 + $0xd8] sm:$0xff]
    %v490 = vld [vmem:[#allocation8 + $0xe0] sm:$0xff]
    %v491 = vld [vmem:[#allocation8 + $0xe8] sm:$0xff]
    %v492 = vld [vmem:[#allocation8 + $0xf0] sm:$0xff]
    %v493 = vld [vmem:[#allocation8 + $0xf8] sm:$0xff]
    %v494 = vld [vmem:[#allocation2] sm:$0xff]
    %v495 = vld [vmem:[#allocation2 + $0x8] sm:$0xff]
    %v496 = vld [vmem:[#allocation2 + $0x10] sm:$0xff]
    %v497 = vld [vmem:[#allocation2 + $0x18] sm:$0xff]
    %v530 = vunpack.c.l.b16 %v462
    %v531 = vunpack.c.h.b16 %v462
    %v532 = vunpack.c.l.b16 %v463
    %v533 = vunpack.c.h.b16 %v463
    %v534 = vunpack.c.l.b16 %v464
    %v535 = vunpack.c.h.b16 %v464
    %v536 = vunpack.c.l.b16 %v465
    %v537 = vunpack.c.h.b16 %v465
    %v538 = vunpack.c.l.b16 %v466
    %v539 = vunpack.c.h.b16 %v466
    %v540 = vunpack.c.l.b16 %v467
    %v541 = vunpack.c.h.b16 %v467
    %v542 = vunpack.c.l.b16 %v468
    %v543 = vunpack.c.h.b16 %v468
    %v544 = vunpack.c.l.b16 %v469
    %v545 = vunpack.c.h.b16 %v469
    %v546 = vunpack.c.l.b16 %v470
    %v547 = vunpack.c.h.b16 %v470
    %v548 = vunpack.c.l.b16 %v471
    %v549 = vunpack.c.h.b16 %v471
    %v550 = vunpack.c.l.b16 %v472
    %v551 = vunpack.c.h.b16 %v472
    %v552 = vunpack.c.l.b16 %v473
    %v553 = vunpack.c.h.b16 %v473
    %v554 = vunpack.c.l.b16 %v474
    %v555 = vunpack.c.h.b16 %v474
    %v556 = vunpack.c.l.b16 %v475
    %v557 = vunpack.c.h.b16 %v475
    %v558 = vunpack.c.l.b16 %v476
    %v559 = vunpack.c.h.b16 %v476
    %v560 = vunpack.c.l.b16 %v477
    %v561 = vunpack.c.h.b16 %v477
    %v562 = vunpack.c.l.b16 %v478
    %v563 = vunpack.c.h.b16 %v478
    %v564 = vunpack.c.l.b16 %v479
    %v565 = vunpack.c.h.b16 %v479
    %v566 = vunpack.c.l.b16 %v480
    %v567 = vunpack.c.h.b16 %v480
    %v568 = vunpack.c.l.b16 %v481
    %v569 = vunpack.c.h.b16 %v481
    %v570 = vunpack.c.l.b16 %v482
    %v571 = vunpack.c.h.b16 %v482
    %v572 = vunpack.c.l.b16 %v483
    %v573 = vunpack.c.h.b16 %v483
    %v574 = vunpack.c.l.b16 %v484
    %v575 = vunpack.c.h.b16 %v484
    %v576 = vunpack.c.l.b16 %v485
    %v577 = vunpack.c.h.b16 %v485
    %v578 = vunpack.c.l.b16 %v486
    %v579 = vunpack.c.h.b16 %v486
    %v580 = vunpack.c.l.b16 %v487
    %v581 = vunpack.c.h.b16 %v487
    %v582 = vunpack.c.l.b16 %v488
    %v583 = vunpack.c.h.b16 %v488
    %v584 = vunpack.c.l.b16 %v489
    %v585 = vunpack.c.h.b16 %v489
    %v586 = vunpack.c.l.b16 %v490
    %v587 = vunpack.c.h.b16 %v490
    %v588 = vunpack.c.l.b16 %v491
    %v589 = vunpack.c.h.b16 %v491
    %v590 = vunpack.c.l.b16 %v492
    %v591 = vunpack.c.h.b16 %v492
    %v592 = vunpack.c.l.b16 %v493
    %v593 = vunpack.c.h.b16 %v493
    %v594 = vpack.c.b16 %v534, %v530
    %v595 = vpack.c.b16 %v535, %v531
    %v596 = vpack.c.b16 %v536, %v532
    %v597 = vpack.c.b16 %v537, %v533
    %v598 = vpack.c.b16 %v542, %v538
    %v599 = vpack.c.b16 %v543, %v539
    %v600 = vpack.c.b16 %v544, %v540
    %v601 = vpack.c.b16 %v545, %v541
    %v602 = vpack.c.b16 %v550, %v546
    %v603 = vpack.c.b16 %v551, %v547
    %v604 = vpack.c.b16 %v552, %v548
    %v605 = vpack.c.b16 %v553, %v549
    %v606 = vpack.c.b16 %v558, %v554
    %v607 = vpack.c.b16 %v559, %v555
    %v608 = vpack.c.b16 %v560, %v556
    %v609 = vpack.c.b16 %v561, %v557
    %v610 = vpack.c.b16 %v566, %v562
    %v611 = vpack.c.b16 %v567, %v563
    %v612 = vpack.c.b16 %v568, %v564
    %v613 = vpack.c.b16 %v569, %v565
    %v614 = vpack.c.b16 %v574, %v570
    %v615 = vpack.c.b16 %v575, %v571
    %v616 = vpack.c.b16 %v576, %v572
    %v617 = vpack.c.b16 %v577, %v573
    %v618 = vpack.c.b16 %v582, %v578
    %v619 = vpack.c.b16 %v583, %v579
    %v620 = vpack.c.b16 %v584, %v580
    %v621 = vpack.c.b16 %v585, %v581
    %v622 = vpack.c.b16 %v590, %v586
    %v623 = vpack.c.b16 %v591, %v587
    %v624 = vpack.c.b16 %v592, %v588
    %v625 = vpack.c.b16 %v593, %v589
    %658 = vmatpush.bf16.msra.mxu0 %v622
    %659 = vmatpush.bf16.msra.mxu0 %v618
    %660 = vmatpush.bf16.msra.mxu0 %v614
    %661 = vmatpush.bf16.msra.mxu0 %v610
    %662 = vmatpush.bf16.msra.mxu0 %v606
    %663 = vmatpush.bf16.msra.mxu0 %v602
    %664 = vmatpush.bf16.msra.mxu0 %v598
    %665 = vmatpush.bf16.msra.mxu0 %v594
    %666 = vmatmul.bf16.gmra.mxu0 0
    %v667 = vpop.f32.mrf.mxu0
    %v668 = vadd.f32 0.0, %v667
    %v669 = vpop.f32.mrf.mxu0
    %670 = vdwg.mxu0
    %671 = vmatpush.bf16.msra.mxu0 %v623
    %672 = vmatpush.bf16.msra.mxu0 %v619
    %673 = vmatpush.bf16.msra.mxu0 %v615
    %674 = vmatpush.bf16.msra.mxu0 %v611
    %675 = vmatpush.bf16.msra.mxu0 %v607
    %676 = vmatpush.bf16.msra.mxu0 %v603
    %677 = vmatpush.bf16.msra.mxu0 %v599
    %678 = vmatpush.bf16.msra.mxu0 %v595
    %679 = vmatmul.bf16.gmra.mxu0 0
    %v680 = vpop.f32.mrf.mxu0
    %v681 = vadd.f32 0.0, %v680
    %v682 = vpop.f32.mrf.mxu0
    %683 = vdwg.mxu0
    %684 = vmatpush.bf16.msra.mxu0 %v624
    %685 = vmatpush.bf16.msra.mxu0 %v620
    %686 = vmatpush.bf16.msra.mxu0 %v616
    %687 = vmatpush.bf16.msra.mxu0 %v612
    %688 = vmatpush.bf16.msra.mxu0 %v608
    %689 = vmatpush.bf16.msra.mxu0 %v604
    %690 = vmatpush.bf16.msra.mxu0 %v600
    %691 = vmatpush.bf16.msra.mxu0 %v596
    %692 = vmatmul.bf16.gmra.mxu0 0
    %v693 = vpop.f32.mrf.mxu0
    %v694 = vadd.f32 0.0, %v693
    %v695 = vpop.f32.mrf.mxu0
    %696 = vdwg.mxu0
    %697 = vmatpush.bf16.msra.mxu0 %v625
    %698 = vmatpush.bf16.msra.mxu0 %v621
    %699 = vmatpush.bf16.msra.mxu0 %v617
    %700 = vmatpush.bf16.msra.mxu0 %v613
    %701 = vmatpush.bf16.msra.mxu0 %v609
    %702 = vmatpush.bf16.msra.mxu0 %v605
    %703 = vmatpush.bf16.msra.mxu0 %v601
    %704 = vmatpush.bf16.msra.mxu0 %v597
    %705 = vmatmul.bf16.gmra.mxu0 0
    %v706 = vpop.f32.mrf.mxu0
    %v707 = vadd.f32 0.0, %v706
    %v708 = vpop.f32.mrf.mxu0
    %709 = vdwg.mxu0
    %v710 = vadd.f32 %v494, %v668
    %v711 = vadd.f32 %v495, %v681
    %v712 = vadd.f32 %v496, %v694
    %v713 = vadd.f32 %v497, %v707
    %v714 = vxor.u32 %v710, 2147483648
    %v715 = vxor.u32 %v711, 2147483648
    %v716 = vxor.u32 %v712, 2147483648
    %v717 = vmul.f32 %v714, 1.442695
    %v718 = vpow.pop %v717
    %v719 = vmul.f32 %v715, 1.442695
    %v720 = vpow.pop %v719
    %v721 = vmul.f32 %v716, 1.442695
    %v722 = vpow.pop %v721
    %v723 = vadd.f32 %v718, 1.0
    %v724 = vadd.f32 %v720, 1.0
    %v725 = vadd.f32 %v722, 1.0
    %v726 = vrcp.pop %v723
    %v727 = vmul.f32 %v723, %v726
    %v728 = vsub.f32 1.0, %v727
    %v729 = vmul.f32 %v726, %v728
    %v730 = vadd.f32 %v726, %v729
    %vm731 = vweird.f32 %v723
    %vm732 = vweird.f32 %v726
    %vm733 = vmor %vm731, %vm732
    %v734 = vsel %vm733, %v726, %v730
    %v735 = vand.u32 2147483647, %v723
    %vm736 = vcmp.eq.f32.partialorder %v735, 8.507059e+37
    %v737 = vand.u32 %v723, 2147483648
    %v738 = vor.u32 1.1754944e-38, %v737
    %v739 = vsel %vm736, %v738, %v734
    %v740 = vmul.f32 1.0, %v739
    %v741 = vrcp.pop %v724
    %v742 = vmul.f32 %v724, %v741
    %v743 = vsub.f32 1.0, %v742
    %v744 = vmul.f32 %v741, %v743
    %v745 = vadd.f32 %v741, %v744
    %vm746 = vweird.f32 %v724
    %vm747 = vweird.f32 %v741
    %vm748 = vmor %vm746, %vm747
    %v749 = vsel %vm748, %v741, %v745
    %v750 = vand.u32 2147483647, %v724
    %vm751 = vcmp.eq.f32.partialorder %v750, 8.507059e+37
    %v752 = vand.u32 %v724, 2147483648
    %v753 = vor.u32 1.1754944e-38, %v752
    %v754 = vsel %vm751, %v753, %v749
    %v755 = vmul.f32 1.0, %v754
    %v756 = vrcp.pop %v725
    %v757 = vmul.f32 %v725, %v756
    %v758 = vsub.f32 1.0, %v757
    %v759 = vmul.f32 %v756, %v758
    %v760 = vadd.f32 %v756, %v759
    %vm761 = vweird.f32 %v725
    %vm762 = vweird.f32 %v756
    %vm763 = vmor %vm761, %vm762
    %v764 = vsel %vm763, %v756, %v760
    %v765 = vand.u32 2147483647, %v725
    %vm766 = vcmp.eq.f32.partialorder %v765, 8.507059e+37
    %v767 = vand.u32 %v725, 2147483648
    %v768 = vor.u32 1.1754944e-38, %v767
    %v769 = vsel %vm766, %v768, %v764
    %v770 = vmul.f32 1.0, %v769
    %v771 = vtanh.pop %v713
    %v772 = vmul.f32 %v755, 0.0
    %v773 = vmul.f32 %v740, %v771
    %v774 = vadd.f32 %v772, %v773
    %v775 = vtanh.pop %v774
    %v776 = vmul.f32 %v770, %v775
    %s777 = scalar_lea.vmem [#allocation2], 32
    %v778 = vld [vmem:[%s777] sm:$0xff]
    %v779 = vld [vmem:[%s777 + $0x8] sm:$0xff]
    %v780 = vld [vmem:[%s777 + $0x10] sm:$0xff]
    %v781 = vld [vmem:[%s777 + $0x18] sm:$0xff]
    %v782 = vpack.c.bf16 %v776, %v776
    %783 = vmatpush.bf16.msra.mxu0 %v622
    %784 = vmatpush.bf16.msra.mxu0 %v618
    %785 = vmatpush.bf16.msra.mxu0 %v614
    %786 = vmatpush.bf16.msra.mxu0 %v610
    %787 = vmatpush.bf16.msra.mxu0 %v606
    %788 = vmatpush.bf16.msra.mxu0 %v602
    %789 = vmatpush.bf16.msra.mxu0 %v598
    %790 = vmatpush.bf16.msra.mxu0 %v594
    %791 = vmatmul.bf16.gmra.mxu0 %v782
    %v792 = vpop.f32.mrf.mxu0
    %v793 = vadd.f32 0.0, %v792
    %v794 = vpop.f32.mrf.mxu0
    %795 = vdwg.mxu0
    %796 = vmatpush.bf16.msra.mxu0 %v623
    %797 = vmatpush.bf16.msra.mxu0 %v619
    %798 = vmatpush.bf16.msra.mxu0 %v615
    %799 = vmatpush.bf16.msra.mxu0 %v611
    %800 = vmatpush.bf16.msra.mxu0 %v607
    %801 = vmatpush.bf16.msra.mxu0 %v603
    %802 = vmatpush.bf16.msra.mxu0 %v599
    %803 = vmatpush.bf16.msra.mxu0 %v595
    %804 = vmatmul.bf16.gmra.mxu0 %v782
    %v805 = vpop.f32.mrf.mxu0
    %v806 = vadd.f32 0.0, %v805
    %v807 = vpop.f32.mrf.mxu0
    %808 = vdwg.mxu0
    %809 = vmatpush.bf16.msra.mxu0 %v624
    %810 = vmatpush.bf16.msra.mxu0 %v620
    %811 = vmatpush.bf16.msra.mxu0 %v616
    %812 = vmatpush.bf16.msra.mxu0 %v612
    %813 = vmatpush.bf16.msra.mxu0 %v608
    %814 = vmatpush.bf16.msra.mxu0 %v604
    %815 = vmatpush.bf16.msra.mxu0 %v600
    %816 = vmatpush.bf16.msra.mxu0 %v596
    %817 = vmatmul.bf16.gmra.mxu0 %v782
    %v818 = vpop.f32.mrf.mxu0
    %v819 = vadd.f32 0.0, %v818
    %v820 = vpop.f32.mrf.mxu0
    %821 = vdwg.mxu0
    %822 = vmatpush.bf16.msra.mxu0 %v625
    %823 = vmatpush.bf16.msra.mxu0 %v621
    %824 = vmatpush.bf16.msra.mxu0 %v617
    %825 = vmatpush.bf16.msra.mxu0 %v613
    %826 = vmatpush.bf16.msra.mxu0 %v609
    %827 = vmatpush.bf16.msra.mxu0 %v605
    %828 = vmatpush.bf16.msra.mxu0 %v601
    %829 = vmatpush.bf16.msra.mxu0 %v597
    %830 = vmatmul.bf16.gmra.mxu0 %v782
    %v831 = vpop.f32.mrf.mxu0
    %v832 = vadd.f32 0.0, %v831
    %v833 = vpop.f32.mrf.mxu0
    %834 = vdwg.mxu0
    %v835 = vadd.f32 %v778, %v793
    %v836 = vadd.f32 %v779, %v806
    %v837 = vadd.f32 %v780, %v819
    %v838 = vadd.f32 %v781, %v832
    %v839 = vxor.u32 %v835, 2147483648
    %v840 = vxor.u32 %v836, 2147483648
    %v841 = vxor.u32 %v837, 2147483648
    %v842 = vmul.f32 %v839, 1.442695
    %v843 = vpow.pop %v842
    %v844 = vmul.f32 %v840, 1.442695
    %v845 = vpow.pop %v844
    %v846 = vmul.f32 %v841, 1.442695
    %v847 = vpow.pop %v846
    %v848 = vadd.f32 %v843, 1.0
    %v849 = vadd.f32 %v845, 1.0
    %v850 = vadd.f32 %v847, 1.0
    %v851 = vrcp.pop %v848
    %v852 = vmul.f32 %v848, %v851
    %v853 = vsub.f32 1.0, %v852
    %v854 = vmul.f32 %v851, %v853
    %v855 = vadd.f32 %v851, %v854
    %vm856 = vweird.f32 %v848
    %vm857 = vweird.f32 %v851
    %vm858 = vmor %vm856, %vm857
    %v859 = vsel %vm858, %v851, %v855
    %v860 = vand.u32 2147483647, %v848
    %vm861 = vcmp.eq.f32.partialorder %v860, 8.507059e+37
    %v862 = vand.u32 %v848, 2147483648
    %v863 = vor.u32 1.1754944e-38, %v862
    %v864 = vsel %vm861, %v863, %v859
    %v865 = vmul.f32 1.0, %v864
    %v866 = vrcp.pop %v849
    %v867 = vmul.f32 %v849, %v866
    %v868 = vsub.f32 1.0, %v867
    %v869 = vmul.f32 %v866, %v868
    %v870 = vadd.f32 %v866, %v869
    %vm871 = vweird.f32 %v849
    %vm872 = vweird.f32 %v866
    %vm873 = vmor %vm871, %vm872
    %v874 = vsel %vm873, %v866, %v870
    %v875 = vand.u32 2147483647, %v849
    %vm876 = vcmp.eq.f32.partialorder %v875, 8.507059e+37
    %v877 = vand.u32 %v849, 2147483648
    %v878 = vor.u32 1.1754944e-38, %v877
    %v879 = vsel %vm876, %v878, %v874
    %v880 = vmul.f32 1.0, %v879
    %v881 = vrcp.pop %v850
    %v882 = vmul.f32 %v850, %v881
    %v883 = vsub.f32 1.0, %v882
    %v884 = vmul.f32 %v881, %v883
    %v885 = vadd.f32 %v881, %v884
    %vm886 = vweird.f32 %v850
    %vm887 = vweird.f32 %v881
    %vm888 = vmor %vm886, %vm887
    %v889 = vsel %vm888, %v881, %v885
    %v890 = vand.u32 2147483647, %v850
    %vm891 = vcmp.eq.f32.partialorder %v890, 8.507059e+37
    %v892 = vand.u32 %v850, 2147483648
    %v893 = vor.u32 1.1754944e-38, %v892
    %v894 = vsel %vm891, %v893, %v889
    %v895 = vmul.f32 1.0, %v894
    %v896 = vtanh.pop %v838
    %v897 = vmul.f32 %v880, %v774
    %v898 = vmul.f32 %v865, %v896
    %v899 = vadd.f32 %v897, %v898
    %v900 = vtanh.pop %v899
    %v901 = vmul.f32 %v895, %v900
    %s902 = scalar_lea.vmem [#allocation2], 64
    %v903 = vld [vmem:[%s902] sm:$0xff]
    %v904 = vld [vmem:[%s902 + $0x8] sm:$0xff]
    %v905 = vld [vmem:[%s902 + $0x10] sm:$0xff]
    %v906 = vld [vmem:[%s902 + $0x18] sm:$0xff]
    %v907 = vpack.c.bf16 %v901, %v901
    %908 = vmatpush.bf16.msra.mxu0 %v622
    %909 = vmatpush.bf16.msra.mxu0 %v618
    %910 = vmatpush.bf16.msra.mxu0 %v614
    %911 = vmatpush.bf16.msra.mxu0 %v610
    %912 = vmatpush.bf16.msra.mxu0 %v606
    %913 = vmatpush.bf16.msra.mxu0 %v602
    %914 = vmatpush.bf16.msra.mxu0 %v598
    %915 = vmatpush.bf16.msra.mxu0 %v594
    %916 = vmatmul.bf16.gmra.mxu0 %v907
    %v917 = vpop.f32.mrf.mxu0
    %v918 = vadd.f32 0.0, %v917
    %v919 = vpop.f32.mrf.mxu0
    %920 = vdwg.mxu0
    %921 = vmatpush.bf16.msra.mxu0 %v623
    %922 = vmatpush.bf16.msra.mxu0 %v619
    %923 = vmatpush.bf16.msra.mxu0 %v615
    %924 = vmatpush.bf16.msra.mxu0 %v611
    %925 = vmatpush.bf16.msra.mxu0 %v607
    %926 = vmatpush.bf16.msra.mxu0 %v603
    %927 = vmatpush.bf16.msra.mxu0 %v599
    %928 = vmatpush.bf16.msra.mxu0 %v595
    %929 = vmatmul.bf16.gmra.mxu0 %v907
    %v930 = vpop.f32.mrf.mxu0
    %v931 = vadd.f32 0.0, %v930
    %v932 = vpop.f32.mrf.mxu0
    %933 = vdwg.mxu0
    %934 = vmatpush.bf16.msra.mxu0 %v624
    %935 = vmatpush.bf16.msra.mxu0 %v620
    %936 = vmatpush.bf16.msra.mxu0 %v616
    %937 = vmatpush.bf16.msra.mxu0 %v612
    %938 = vmatpush.bf16.msra.mxu0 %v608
    %939 = vmatpush.bf16.msra.mxu0 %v604
    %940 = vmatpush.bf16.msra.mxu0 %v600
    %941 = vmatpush.bf16.msra.mxu0 %v596
    %942 = vmatmul.bf16.gmra.mxu0 %v907
    %v943 = vpop.f32.mrf.mxu0
    %v944 = vadd.f32 0.0, %v943
    %v945 = vpop.f32.mrf.mxu0
    %946 = vdwg.mxu0
    %947 = vmatpush.bf16.msra.mxu0 %v625
    %948 = vmatpush.bf16.msra.mxu0 %v621
    %949 = vmatpush.bf16.msra.mxu0 %v617
    %950 = vmatpush.bf16.msra.mxu0 %v613
    %951 = vmatpush.bf16.msra.mxu0 %v609
    %952 = vmatpush.bf16.msra.mxu0 %v605
    %953 = vmatpush.bf16.msra.mxu0 %v601
    %954 = vmatpush.bf16.msra.mxu0 %v597
    %955 = vmatmul.bf16.gmra.mxu0 %v907
    %v956 = vpop.f32.mrf.mxu0
    %v957 = vadd.f32 0.0, %v956
    %v958 = vpop.f32.mrf.mxu0
    %959 = vdwg.mxu0
    %v960 = vadd.f32 %v903, %v918
    %v961 = vadd.f32 %v904, %v931
    %v962 = vadd.f32 %v905, %v944
    %v963 = vadd.f32 %v906, %v957
    %v964 = vxor.u32 %v960, 2147483648
    %v965 = vxor.u32 %v961, 2147483648
    %v966 = vxor.u32 %v962, 2147483648
    %v967 = vmul.f32 %v964, 1.442695
    %v968 = vpow.pop %v967
    %v969 = vmul.f32 %v965, 1.442695
    %v970 = vpow.pop %v969
    %v971 = vmul.f32 %v966, 1.442695
    %v972 = vpow.pop %v971
    %v973 = vadd.f32 %v968, 1.0
    %v974 = vadd.f32 %v970, 1.0
    %v975 = vadd.f32 %v972, 1.0
    %v976 = vrcp.pop %v973
    %v977 = vmul.f32 %v973, %v976
    %v978 = vsub.f32 1.0, %v977
    %v979 = vmul.f32 %v976, %v978
    %v980 = vadd.f32 %v976, %v979
    %vm981 = vweird.f32 %v973
    %vm982 = vweird.f32 %v976
    %vm983 = vmor %vm981, %vm982
    %v984 = vsel %vm983, %v976, %v980
    %v985 = vand.u32 2147483647, %v973
    %vm986 = vcmp.eq.f32.partialorder %v985, 8.507059e+37
    %v987 = vand.u32 %v973, 2147483648
    %v988 = vor.u32 1.1754944e-38, %v987
    %v989 = vsel %vm986, %v988, %v984
    %v990 = vmul.f32 1.0, %v989
    %v991 = vrcp.pop %v974
    %v992 = vmul.f32 %v974, %v991
    %v993 = vsub.f32 1.0, %v992
    %v994 = vmul.f32 %v991, %v993
    %v995 = vadd.f32 %v991, %v994
    %vm996 = vweird.f32 %v974
    %vm997 = vweird.f32 %v991
    %vm998 = vmor %vm996, %vm997
    %v999 = vsel %vm998, %v991, %v995
    %v1000 = vand.u32 2147483647, %v974
    %vm1001 = vcmp.eq.f32.partialorder %v1000, 8.507059e+37
    %v1002 = vand.u32 %v974, 2147483648
    %v1003 = vor.u32 1.1754944e-38, %v1002
    %v1004 = vsel %vm1001, %v1003, %v999
    %v1005 = vmul.f32 1.0, %v1004
    %v1006 = vrcp.pop %v975
    %v1007 = vmul.f32 %v975, %v1006
    %v1008 = vsub.f32 1.0, %v1007
    %v1009 = vmul.f32 %v1006, %v1008
    %v1010 = vadd.f32 %v1006, %v1009
    %vm1011 = vweird.f32 %v975
    %vm1012 = vweird.f32 %v1006
    %vm1013 = vmor %vm1011, %vm1012
    %v1014 = vsel %vm1013, %v1006, %v1010
    %v1015 = vand.u32 2147483647, %v975
    %vm1016 = vcmp.eq.f32.partialorder %v1015, 8.507059e+37
    %v1017 = vand.u32 %v975, 2147483648
    %v1018 = vor.u32 1.1754944e-38, %v1017
    %v1019 = vsel %vm1016, %v1018, %v1014
    %v1020 = vmul.f32 1.0, %v1019
    %v1021 = vtanh.pop %v963
    %v1022 = vmul.f32 %v1005, %v899
    %v1023 = vmul.f32 %v990, %v1021
    %v1024 = vadd.f32 %v1022, %v1023
    %v1025 = vtanh.pop %v1024
    %v1026 = vmul.f32 %v1020, %v1025
    %s1027 = scalar_lea.vmem [#allocation2], 96
    %v1028 = vld [vmem:[%s1027] sm:$0xff]
    %v1029 = vld [vmem:[%s1027 + $0x8] sm:$0xff]
    %v1030 = vld [vmem:[%s1027 + $0x10] sm:$0xff]
    %v1031 = vld [vmem:[%s1027 + $0x18] sm:$0xff]
    %v1032 = vpack.c.bf16 %v1026, %v1026
    %1033 = vmatpush.bf16.msra.mxu0 %v622
    %1034 = vmatpush.bf16.msra.mxu0 %v618
    %1035 = vmatpush.bf16.msra.mxu0 %v614
    %1036 = vmatpush.bf16.msra.mxu0 %v610
    %1037 = vmatpush.bf16.msra.mxu0 %v606
    %1038 = vmatpush.bf16.msra.mxu0 %v602
    %1039 = vmatpush.bf16.msra.mxu0 %v598
    %1040 = vmatpush.bf16.msra.mxu0 %v594
    %1041 = vmatmul.bf16.gmra.mxu0 %v1032
    %v1042 = vpop.f32.mrf.mxu0
    %v1043 = vadd.f32 0.0, %v1042
    %v1044 = vpop.f32.mrf.mxu0
    %1045 = vdwg.mxu0
    %1046 = vmatpush.bf16.msra.mxu0 %v623
    %1047 = vmatpush.bf16.msra.mxu0 %v619
    %1048 = vmatpush.bf16.msra.mxu0 %v615
    %1049 = vmatpush.bf16.msra.mxu0 %v611
    %1050 = vmatpush.bf16.msra.mxu0 %v607
    %1051 = vmatpush.bf16.msra.mxu0 %v603
    %1052 = vmatpush.bf16.msra.mxu0 %v599
    %1053 = vmatpush.bf16.msra.mxu0 %v595
    %1054 = vmatmul.bf16.gmra.mxu0 %v1032
    %v1055 = vpop.f32.mrf.mxu0
    %v1056 = vadd.f32 0.0, %v1055
    %v1057 = vpop.f32.mrf.mxu0
    %1058 = vdwg.mxu0
    %1059 = vmatpush.bf16.msra.mxu0 %v624
    %1060 = vmatpush.bf16.msra.mxu0 %v620
    %1061 = vmatpush.bf16.msra.mxu0 %v616
    %1062 = vmatpush.bf16.msra.mxu0 %v612
    %1063 = vmatpush.bf16.msra.mxu0 %v608
    %1064 = vmatpush.bf16.msra.mxu0 %v604
    %1065 = vmatpush.bf16.msra.mxu0 %v600
    %1066 = vmatpush.bf16.msra.mxu0 %v596
    %1067 = vmatmul.bf16.gmra.mxu0 %v1032
    %v1068 = vpop.f32.mrf.mxu0
    %v1069 = vadd.f32 0.0, %v1068
    %v1070 = vpop.f32.mrf.mxu0
    %1071 = vdwg.mxu0
    %1072 = vmatpush.bf16.msra.mxu0 %v625
    %1073 = vmatpush.bf16.msra.mxu0 %v621
    %1074 = vmatpush.bf16.msra.mxu0 %v617
    %1075 = vmatpush.bf16.msra.mxu0 %v613
    %1076 = vmatpush.bf16.msra.mxu0 %v609
    %1077 = vmatpush.bf16.msra.mxu0 %v605
    %1078 = vmatpush.bf16.msra.mxu0 %v601
    %1079 = vmatpush.bf16.msra.mxu0 %v597
    %1080 = vmatmul.bf16.gmra.mxu0 %v1032
    %v1081 = vpop.f32.mrf.mxu0
    %v1082 = vadd.f32 0.0, %v1081
    %v1083 = vpop.f32.mrf.mxu0
    %1084 = vdwg.mxu0
    %v1085 = vadd.f32 %v1028, %v1043
    %v1086 = vadd.f32 %v1029, %v1056
    %v1087 = vadd.f32 %v1030, %v1069
    %v1088 = vadd.f32 %v1031, %v1082
    %v1089 = vxor.u32 %v1085, 2147483648
    %v1090 = vxor.u32 %v1086, 2147483648
    %v1091 = vxor.u32 %v1087, 2147483648
    %v1092 = vmul.f32 %v1089, 1.442695
    %v1093 = vpow.pop %v1092
    %v1094 = vmul.f32 %v1090, 1.442695
    %v1095 = vpow.pop %v1094
    %v1096 = vmul.f32 %v1091, 1.442695
    %v1097 = vpow.pop %v1096
    %v1098 = vadd.f32 %v1093, 1.0
    %v1099 = vadd.f32 %v1095, 1.0
    %v1100 = vadd.f32 %v1097, 1.0
    %v1101 = vrcp.pop %v1098
    %v1102 = vmul.f32 %v1098, %v1101
    %v1103 = vsub.f32 1.0, %v1102
    %v1104 = vmul.f32 %v1101, %v1103
    %v1105 = vadd.f32 %v1101, %v1104
    %vm1106 = vweird.f32 %v1098
    %vm1107 = vweird.f32 %v1101
    %vm1108 = vmor %vm1106, %vm1107
    %v1109 = vsel %vm1108, %v1101, %v1105
    %v1110 = vand.u32 2147483647, %v1098
    %vm1111 = vcmp.eq.f32.partialorder %v1110, 8.507059e+37
    %v1112 = vand.u32 %v1098, 2147483648
    %v1113 = vor.u32 1.1754944e-38, %v1112
    %v1114 = vsel %vm1111, %v1113, %v1109
    %v1115 = vmul.f32 1.0, %v1114
    %v1116 = vrcp.pop %v1099
    %v1117 = vmul.f32 %v1099, %v1116
    %v1118 = vsub.f32 1.0, %v1117
    %v1119 = vmul.f32 %v1116, %v1118
    %v1120 = vadd.f32 %v1116, %v1119
    %vm1121 = vweird.f32 %v1099
    %vm1122 = vweird.f32 %v1116
    %vm1123 = vmor %vm1121, %vm1122
    %v1124 = vsel %vm1123, %v1116, %v1120
    %v1125 = vand.u32 2147483647, %v1099
    %vm1126 = vcmp.eq.f32.partialorder %v1125, 8.507059e+37
    %v1127 = vand.u32 %v1099, 2147483648
    %v1128 = vor.u32 1.1754944e-38, %v1127
    %v1129 = vsel %vm1126, %v1128, %v1124
    %v1130 = vmul.f32 1.0, %v1129
    %v1131 = vrcp.pop %v1100
    %v1132 = vmul.f32 %v1100, %v1131
    %v1133 = vsub.f32 1.0, %v1132
    %v1134 = vmul.f32 %v1131, %v1133
    %v1135 = vadd.f32 %v1131, %v1134
    %vm1136 = vweird.f32 %v1100
    %vm1137 = vweird.f32 %v1131
    %vm1138 = vmor %vm1136, %vm1137
    %v1139 = vsel %vm1138, %v1131, %v1135
    %v1140 = vand.u32 2147483647, %v1100
    %vm1141 = vcmp.eq.f32.partialorder %v1140, 8.507059e+37
    %v1142 = vand.u32 %v1100, 2147483648
    %v1143 = vor.u32 1.1754944e-38, %v1142
    %v1144 = vsel %vm1141, %v1143, %v1139
    %v1145 = vmul.f32 1.0, %v1144
    %v1146 = vtanh.pop %v1088
    %v1147 = vmul.f32 %v1130, %v1024
    %v1148 = vmul.f32 %v1115, %v1146
    %v1149 = vadd.f32 %v1147, %v1148
    %v1150 = vtanh.pop %v1149
    %v1151 = vmul.f32 %v1145, %v1150
    %s1152 = scalar_lea.vmem [#allocation2], 128
    %v1153 = vld [vmem:[%s1152] sm:$0xff]
    %v1154 = vld [vmem:[%s1152 + $0x8] sm:$0xff]
    %v1155 = vld [vmem:[%s1152 + $0x10] sm:$0xff]
    %v1156 = vld [vmem:[%s1152 + $0x18] sm:$0xff]
    %v1157 = vpack.c.bf16 %v1151, %v1151
    %1158 = vmatpush.bf16.msra.mxu0 %v622
    %1159 = vmatpush.bf16.msra.mxu0 %v618
    %1160 = vmatpush.bf16.msra.mxu0 %v614
    %1161 = vmatpush.bf16.msra.mxu0 %v610
    %1162 = vmatpush.bf16.msra.mxu0 %v606
    %1163 = vmatpush.bf16.msra.mxu0 %v602
    %1164 = vmatpush.bf16.msra.mxu0 %v598
    %1165 = vmatpush.bf16.msra.mxu0 %v594
    %1166 = vmatmul.bf16.gmra.mxu0 %v1157
    %v1167 = vpop.f32.mrf.mxu0
    %v1168 = vadd.f32 0.0, %v1167
    %v1169 = vpop.f32.mrf.mxu0
    %1170 = vdwg.mxu0
    %1171 = vmatpush.bf16.msra.mxu0 %v623
    %1172 = vmatpush.bf16.msra.mxu0 %v619
    %1173 = vmatpush.bf16.msra.mxu0 %v615
    %1174 = vmatpush.bf16.msra.mxu0 %v611
    %1175 = vmatpush.bf16.msra.mxu0 %v607
    %1176 = vmatpush.bf16.msra.mxu0 %v603
    %1177 = vmatpush.bf16.msra.mxu0 %v599
    %1178 = vmatpush.bf16.msra.mxu0 %v595
    %1179 = vmatmul.bf16.gmra.mxu0 %v1157
    %v1180 = vpop.f32.mrf.mxu0
    %v1181 = vadd.f32 0.0, %v1180
    %v1182 = vpop.f32.mrf.mxu0
    %1183 = vdwg.mxu0
    %1184 = vmatpush.bf16.msra.mxu0 %v624
    %1185 = vmatpush.bf16.msra.mxu0 %v620
    %1186 = vmatpush.bf16.msra.mxu0 %v616
    %1187 = vmatpush.bf16.msra.mxu0 %v612
    %1188 = vmatpush.bf16.msra.mxu0 %v608
    %1189 = vmatpush.bf16.msra.mxu0 %v604
    %1190 = vmatpush.bf16.msra.mxu0 %v600
    %1191 = vmatpush.bf16.msra.mxu0 %v596
    %1192 = vmatmul.bf16.gmra.mxu0 %v1157
    %v1193 = vpop.f32.mrf.mxu0
    %v1194 = vadd.f32 0.0, %v1193
    %v1195 = vpop.f32.mrf.mxu0
    %1196 = vdwg.mxu0
    %1197 = vmatpush.bf16.msra.mxu0 %v625
    %1198 = vmatpush.bf16.msra.mxu0 %v621
    %1199 = vmatpush.bf16.msra.mxu0 %v617
    %1200 = vmatpush.bf16.msra.mxu0 %v613
    %1201 = vmatpush.bf16.msra.mxu0 %v609
    %1202 = vmatpush.bf16.msra.mxu0 %v605
    %1203 = vmatpush.bf16.msra.mxu0 %v601
    %1204 = vmatpush.bf16.msra.mxu0 %v597
    %1205 = vmatmul.bf16.gmra.mxu0 %v1157
    %v1206 = vpop.f32.mrf.mxu0
    %v1207 = vadd.f32 0.0, %v1206
    %v1208 = vpop.f32.mrf.mxu0
    %1209 = vdwg.mxu0
    %v1210 = vadd.f32 %v1153, %v1168
    %v1211 = vadd.f32 %v1154, %v1181
    %v1212 = vadd.f32 %v1155, %v1194
    %v1213 = vadd.f32 %v1156, %v1207
    %v1214 = vxor.u32 %v1210, 2147483648
    %v1215 = vxor.u32 %v1211, 2147483648
    %v1216 = vxor.u32 %v1212, 2147483648
    %v1217 = vmul.f32 %v1214, 1.442695
    %v1218 = vpow.pop %v1217
    %v1219 = vmul.f32 %v1215, 1.442695
    %v1220 = vpow.pop %v1219
    %v1221 = vmul.f32 %v1216, 1.442695
    %v1222 = vpow.pop %v1221
    %v1223 = vadd.f32 %v1218, 1.0
    %v1224 = vadd.f32 %v1220, 1.0
    %v1225 = vadd.f32 %v1222, 1.0
    %v1226 = vrcp.pop %v1223
    %v1227 = vmul.f32 %v1223, %v1226
    %v1228 = vsub.f32 1.0, %v1227
    %v1229 = vmul.f32 %v1226, %v1228
    %v1230 = vadd.f32 %v1226, %v1229
    %vm1231 = vweird.f32 %v1223
    %vm1232 = vweird.f32 %v1226
    %vm1233 = vmor %vm1231, %vm1232
    %v1234 = vsel %vm1233, %v1226, %v1230
    %v1235 = vand.u32 2147483647, %v1223
    %vm1236 = vcmp.eq.f32.partialorder %v1235, 8.507059e+37
    %v1237 = vand.u32 %v1223, 2147483648
    %v1238 = vor.u32 1.1754944e-38, %v1237
    %v1239 = vsel %vm1236, %v1238, %v1234
    %v1240 = vmul.f32 1.0, %v1239
    %v1241 = vrcp.pop %v1224
    %v1242 = vmul.f32 %v1224, %v1241
    %v1243 = vsub.f32 1.0, %v1242
    %v1244 = vmul.f32 %v1241, %v1243
    %v1245 = vadd.f32 %v1241, %v1244
    %vm1246 = vweird.f32 %v1224
    %vm1247 = vweird.f32 %v1241
    %vm1248 = vmor %vm1246, %vm1247
    %v1249 = vsel %vm1248, %v1241, %v1245
    %v1250 = vand.u32 2147483647, %v1224
    %vm1251 = vcmp.eq.f32.partialorder %v1250, 8.507059e+37
    %v1252 = vand.u32 %v1224, 2147483648
    %v1253 = vor.u32 1.1754944e-38, %v1252
    %v1254 = vsel %vm1251, %v1253, %v1249
    %v1255 = vmul.f32 1.0, %v1254
    %v1256 = vrcp.pop %v1225
    %v1257 = vmul.f32 %v1225, %v1256
    %v1258 = vsub.f32 1.0, %v1257
    %v1259 = vmul.f32 %v1256, %v1258
    %v1260 = vadd.f32 %v1256, %v1259
    %vm1261 = vweird.f32 %v1225
    %vm1262 = vweird.f32 %v1256
    %vm1263 = vmor %vm1261, %vm1262
    %v1264 = vsel %vm1263, %v1256, %v1260
    %v1265 = vand.u32 2147483647, %v1225
    %vm1266 = vcmp.eq.f32.partialorder %v1265, 8.507059e+37
    %v1267 = vand.u32 %v1225, 2147483648
    %v1268 = vor.u32 1.1754944e-38, %v1267
    %v1269 = vsel %vm1266, %v1268, %v1264
    %v1270 = vmul.f32 1.0, %v1269
    %v1271 = vtanh.pop %v1213
    %v1272 = vmul.f32 %v1255, %v1149
    %v1273 = vmul.f32 %v1240, %v1271
    %v1274 = vadd.f32 %v1272, %v1273
    %v1275 = vtanh.pop %v1274
    %v1276 = vmul.f32 %v1270, %v1275
    %s1277 = scalar_lea.vmem [#allocation2], 160
    %v1278 = vld [vmem:[%s1277] sm:$0xff]
    %v1279 = vld [vmem:[%s1277 + $0x8] sm:$0xff]
    %v1280 = vld [vmem:[%s1277 + $0x10] sm:$0xff]
    %v1281 = vld [vmem:[%s1277 + $0x18] sm:$0xff]
    %v1282 = vpack.c.bf16 %v1276, %v1276
    %1283 = vmatpush.bf16.msra.mxu0 %v622
    %1284 = vmatpush.bf16.msra.mxu0 %v618
    %1285 = vmatpush.bf16.msra.mxu0 %v614
    %1286 = vmatpush.bf16.msra.mxu0 %v610
    %1287 = vmatpush.bf16.msra.mxu0 %v606
    %1288 = vmatpush.bf16.msra.mxu0 %v602
    %1289 = vmatpush.bf16.msra.mxu0 %v598
    %1290 = vmatpush.bf16.msra.mxu0 %v594
    %1291 = vmatmul.bf16.gmra.mxu0 %v1282
    %v1292 = vpop.f32.mrf.mxu0
    %v1293 = vadd.f32 0.0, %v1292
    %v1294 = vpop.f32.mrf.mxu0
    %1295 = vdwg.mxu0
    %1296 = vmatpush.bf16.msra.mxu0 %v623
    %1297 = vmatpush.bf16.msra.mxu0 %v619
    %1298 = vmatpush.bf16.msra.mxu0 %v615
    %1299 = vmatpush.bf16.msra.mxu0 %v611
    %1300 = vmatpush.bf16.msra.mxu0 %v607
    %1301 = vmatpush.bf16.msra.mxu0 %v603
    %1302 = vmatpush.bf16.msra.mxu0 %v599
    %1303 = vmatpush.bf16.msra.mxu0 %v595
    %1304 = vmatmul.bf16.gmra.mxu0 %v1282
    %v1305 = vpop.f32.mrf.mxu0
    %v1306 = vadd.f32 0.0, %v1305
    %v1307 = vpop.f32.mrf.mxu0
    %1308 = vdwg.mxu0
    %1309 = vmatpush.bf16.msra.mxu0 %v624
    %1310 = vmatpush.bf16.msra.mxu0 %v620
    %1311 = vmatpush.bf16.msra.mxu0 %v616
    %1312 = vmatpush.bf16.msra.mxu0 %v612
    %1313 = vmatpush.bf16.msra.mxu0 %v608
    %1314 = vmatpush.bf16.msra.mxu0 %v604
    %1315 = vmatpush.bf16.msra.mxu0 %v600
    %1316 = vmatpush.bf16.msra.mxu0 %v596
    %1317 = vmatmul.bf16.gmra.mxu0 %v1282
    %v1318 = vpop.f32.mrf.mxu0
    %v1319 = vadd.f32 0.0, %v1318
    %v1320 = vpop.f32.mrf.mxu0
    %1321 = vdwg.mxu0
    %1322 = vmatpush.bf16.msra.mxu0 %v625
    %1323 = vmatpush.bf16.msra.mxu0 %v621
    %1324 = vmatpush.bf16.msra.mxu0 %v617
    %1325 = vmatpush.bf16.msra.mxu0 %v613
    %1326 = vmatpush.bf16.msra.mxu0 %v609
    %1327 = vmatpush.bf16.msra.mxu0 %v605
    %1328 = vmatpush.bf16.msra.mxu0 %v601
    %1329 = vmatpush.bf16.msra.mxu0 %v597
    %1330 = vmatmul.bf16.gmra.mxu0 %v1282
    %v1331 = vpop.f32.mrf.mxu0
    %v1332 = vadd.f32 0.0, %v1331
    %v1333 = vpop.f32.mrf.mxu0
    %1334 = vdwg.mxu0
    %v1335 = vadd.f32 %v1278, %v1293
    %v1336 = vadd.f32 %v1279, %v1306
    %v1337 = vadd.f32 %v1280, %v1319
    %v1338 = vadd.f32 %v1281, %v1332
    %v1339 = vxor.u32 %v1335, 2147483648
    %v1340 = vxor.u32 %v1336, 2147483648
    %v1341 = vxor.u32 %v1337, 2147483648
    %v1342 = vmul.f32 %v1339, 1.442695
    %v1343 = vpow.pop %v1342
    %v1344 = vmul.f32 %v1340, 1.442695
    %v1345 = vpow.pop %v1344
    %v1346 = vmul.f32 %v1341, 1.442695
    %v1347 = vpow.pop %v1346
    %v1348 = vadd.f32 %v1343, 1.0
    %v1349 = vadd.f32 %v1345, 1.0
    %v1350 = vadd.f32 %v1347, 1.0
    %v1351 = vrcp.pop %v1348
    %v1352 = vmul.f32 %v1348, %v1351
    %v1353 = vsub.f32 1.0, %v1352
    %v1354 = vmul.f32 %v1351, %v1353
    %v1355 = vadd.f32 %v1351, %v1354
    %vm1356 = vweird.f32 %v1348
    %vm1357 = vweird.f32 %v1351
    %vm1358 = vmor %vm1356, %vm1357
    %v1359 = vsel %vm1358, %v1351, %v1355
    %v1360 = vand.u32 2147483647, %v1348
    %vm1361 = vcmp.eq.f32.partialorder %v1360, 8.507059e+37
    %v1362 = vand.u32 %v1348, 2147483648
    %v1363 = vor.u32 1.1754944e-38, %v1362
    %v1364 = vsel %vm1361, %v1363, %v1359
    %v1365 = vmul.f32 1.0, %v1364
    %v1366 = vrcp.pop %v1349
    %v1367 = vmul.f32 %v1349, %v1366
    %v1368 = vsub.f32 1.0, %v1367
    %v1369 = vmul.f32 %v1366, %v1368
    %v1370 = vadd.f32 %v1366, %v1369
    %vm1371 = vweird.f32 %v1349
    %vm1372 = vweird.f32 %v1366
    %vm1373 = vmor %vm1371, %vm1372
    %v1374 = vsel %vm1373, %v1366, %v1370
    %v1375 = vand.u32 2147483647, %v1349
    %vm1376 = vcmp.eq.f32.partialorder %v1375, 8.507059e+37
    %v1377 = vand.u32 %v1349, 2147483648
    %v1378 = vor.u32 1.1754944e-38, %v1377
    %v1379 = vsel %vm1376, %v1378, %v1374
    %v1380 = vmul.f32 1.0, %v1379
    %v1381 = vrcp.pop %v1350
    %v1382 = vmul.f32 %v1350, %v1381
    %v1383 = vsub.f32 1.0, %v1382
    %v1384 = vmul.f32 %v1381, %v1383
    %v1385 = vadd.f32 %v1381, %v1384
    %vm1386 = vweird.f32 %v1350
    %vm1387 = vweird.f32 %v1381
    %vm1388 = vmor %vm1386, %vm1387
    %v1389 = vsel %vm1388, %v1381, %v1385
    %v1390 = vand.u32 2147483647, %v1350
    %vm1391 = vcmp.eq.f32.partialorder %v1390, 8.507059e+37
    %v1392 = vand.u32 %v1350, 2147483648
    %v1393 = vor.u32 1.1754944e-38, %v1392
    %v1394 = vsel %vm1391, %v1393, %v1389
    %v1395 = vmul.f32 1.0, %v1394
    %v1396 = vtanh.pop %v1338
    %v1397 = vmul.f32 %v1380, %v1274
    %v1398 = vmul.f32 %v1365, %v1396
    %v1399 = vadd.f32 %v1397, %v1398
    %v1400 = vtanh.pop %v1399
    %v1401 = vmul.f32 %v1395, %v1400
    %s1402 = scalar_lea.vmem [#allocation2], 192
    %v1403 = vld [vmem:[%s1402] sm:$0xff]
    %v1404 = vld [vmem:[%s1402 + $0x8] sm:$0xff]
    %v1405 = vld [vmem:[%s1402 + $0x10] sm:$0xff]
    %v1406 = vld [vmem:[%s1402 + $0x18] sm:$0xff]
    %v1407 = vpack.c.bf16 %v1401, %v1401
    %1408 = vmatpush.bf16.msra.mxu0 %v622
    %1409 = vmatpush.bf16.msra.mxu0 %v618
    %1410 = vmatpush.bf16.msra.mxu0 %v614
    %1411 = vmatpush.bf16.msra.mxu0 %v610
    %1412 = vmatpush.bf16.msra.mxu0 %v606
    %1413 = vmatpush.bf16.msra.mxu0 %v602
    %1414 = vmatpush.bf16.msra.mxu0 %v598
    %1415 = vmatpush.bf16.msra.mxu0 %v594
    %1416 = vmatmul.bf16.gmra.mxu0 %v1407
    %v1417 = vpop.f32.mrf.mxu0
    %v1418 = vadd.f32 0.0, %v1417
    %v1419 = vpop.f32.mrf.mxu0
    %1420 = vdwg.mxu0
    %1421 = vmatpush.bf16.msra.mxu0 %v623
    %1422 = vmatpush.bf16.msra.mxu0 %v619
    %1423 = vmatpush.bf16.msra.mxu0 %v615
    %1424 = vmatpush.bf16.msra.mxu0 %v611
    %1425 = vmatpush.bf16.msra.mxu0 %v607
    %1426 = vmatpush.bf16.msra.mxu0 %v603
    %1427 = vmatpush.bf16.msra.mxu0 %v599
    %1428 = vmatpush.bf16.msra.mxu0 %v595
    %1429 = vmatmul.bf16.gmra.mxu0 %v1407
    %v1430 = vpop.f32.mrf.mxu0
    %v1431 = vadd.f32 0.0, %v1430
    %v1432 = vpop.f32.mrf.mxu0
    %1433 = vdwg.mxu0
    %1434 = vmatpush.bf16.msra.mxu0 %v624
    %1435 = vmatpush.bf16.msra.mxu0 %v620
    %1436 = vmatpush.bf16.msra.mxu0 %v616
    %1437 = vmatpush.bf16.msra.mxu0 %v612
    %1438 = vmatpush.bf16.msra.mxu0 %v608
    %1439 = vmatpush.bf16.msra.mxu0 %v604
    %1440 = vmatpush.bf16.msra.mxu0 %v600
    %1441 = vmatpush.bf16.msra.mxu0 %v596
    %1442 = vmatmul.bf16.gmra.mxu0 %v1407
    %v1443 = vpop.f32.mrf.mxu0
    %v1444 = vadd.f32 0.0, %v1443
    %v1445 = vpop.f32.mrf.mxu0
    %1446 = vdwg.mxu0
    %1447 = vmatpush.bf16.msra.mxu0 %v625
    %1448 = vmatpush.bf16.msra.mxu0 %v621
    %1449 = vmatpush.bf16.msra.mxu0 %v617
    %1450 = vmatpush.bf16.msra.mxu0 %v613
    %1451 = vmatpush.bf16.msra.mxu0 %v609
    %1452 = vmatpush.bf16.msra.mxu0 %v605
    %1453 = vmatpush.bf16.msra.mxu0 %v601
    %1454 = vmatpush.bf16.msra.mxu0 %v597
    %1455 = vmatmul.bf16.gmra.mxu0 %v1407
    %v1456 = vpop.f32.mrf.mxu0
    %v1457 = vadd.f32 0.0, %v1456
    %v1458 = vpop.f32.mrf.mxu0
    %1459 = vdwg.mxu0
    %v1460 = vadd.f32 %v1403, %v1418
    %v1461 = vadd.f32 %v1404, %v1431
    %v1462 = vadd.f32 %v1405, %v1444
    %v1463 = vadd.f32 %v1406, %v1457
    %v1464 = vxor.u32 %v1460, 2147483648
    %v1465 = vxor.u32 %v1461, 2147483648
    %v1466 = vxor.u32 %v1462, 2147483648
    %v1467 = vmul.f32 %v1464, 1.442695
    %v1468 = vpow.pop %v1467
    %v1469 = vmul.f32 %v1465, 1.442695
    %v1470 = vpow.pop %v1469
    %v1471 = vmul.f32 %v1466, 1.442695
    %v1472 = vpow.pop %v1471
    %v1473 = vadd.f32 %v1468, 1.0
    %v1474 = vadd.f32 %v1470, 1.0
    %v1475 = vadd.f32 %v1472, 1.0
    %v1476 = vrcp.pop %v1473
    %v1477 = vmul.f32 %v1473, %v1476
    %v1478 = vsub.f32 1.0, %v1477
    %v1479 = vmul.f32 %v1476, %v1478
    %v1480 = vadd.f32 %v1476, %v1479
    %vm1481 = vweird.f32 %v1473
    %vm1482 = vweird.f32 %v1476
    %vm1483 = vmor %vm1481, %vm1482
    %v1484 = vsel %vm1483, %v1476, %v1480
    %v1485 = vand.u32 2147483647, %v1473
    %vm1486 = vcmp.eq.f32.partialorder %v1485, 8.507059e+37
    %v1487 = vand.u32 %v1473, 2147483648
    %v1488 = vor.u32 1.1754944e-38, %v1487
    %v1489 = vsel %vm1486, %v1488, %v1484
    %v1490 = vmul.f32 1.0, %v1489
    %v1491 = vrcp.pop %v1474
    %v1492 = vmul.f32 %v1474, %v1491
    %v1493 = vsub.f32 1.0, %v1492
    %v1494 = vmul.f32 %v1491, %v1493
    %v1495 = vadd.f32 %v1491, %v1494
    %vm1496 = vweird.f32 %v1474
    %vm1497 = vweird.f32 %v1491
    %vm1498 = vmor %vm1496, %vm1497
    %v1499 = vsel %vm1498, %v1491, %v1495
    %v1500 = vand.u32 2147483647, %v1474
    %vm1501 = vcmp.eq.f32.partialorder %v1500, 8.507059e+37
    %v1502 = vand.u32 %v1474, 2147483648
    %v1503 = vor.u32 1.1754944e-38, %v1502
    %v1504 = vsel %vm1501, %v1503, %v1499
    %v1505 = vmul.f32 1.0, %v1504
    %v1506 = vrcp.pop %v1475
    %v1507 = vmul.f32 %v1475, %v1506
    %v1508 = vsub.f32 1.0, %v1507
    %v1509 = vmul.f32 %v1506, %v1508
    %v1510 = vadd.f32 %v1506, %v1509
    %vm1511 = vweird.f32 %v1475
    %vm1512 = vweird.f32 %v1506
    %vm1513 = vmor %vm1511, %vm1512
    %v1514 = vsel %vm1513, %v1506, %v1510
    %v1515 = vand.u32 2147483647, %v1475
    %vm1516 = vcmp.eq.f32.partialorder %v1515, 8.507059e+37
    %v1517 = vand.u32 %v1475, 2147483648
    %v1518 = vor.u32 1.1754944e-38, %v1517
    %v1519 = vsel %vm1516, %v1518, %v1514
    %v1520 = vmul.f32 1.0, %v1519
    %v1521 = vtanh.pop %v1463
    %v1522 = vmul.f32 %v1505, %v1399
    %v1523 = vmul.f32 %v1490, %v1521
    %v1524 = vadd.f32 %v1522, %v1523
    %v1525 = vtanh.pop %v1524
    %v1526 = vmul.f32 %v1520, %v1525
    %s1527 = scalar_lea.vmem [#allocation2], 224
    %v1528 = vld [vmem:[%s1527] sm:$0xff]
    %v1529 = vld [vmem:[%s1527 + $0x8] sm:$0xff]
    %v1530 = vld [vmem:[%s1527 + $0x10] sm:$0xff]
    %v1531 = vld [vmem:[%s1527 + $0x18] sm:$0xff]
    %v1532 = vpack.c.bf16 %v1526, %v1526
    %1533 = vmatpush.bf16.msra.mxu0 %v622
    %1534 = vmatpush.bf16.msra.mxu0 %v618
    %1535 = vmatpush.bf16.msra.mxu0 %v614
    %1536 = vmatpush.bf16.msra.mxu0 %v610
    %1537 = vmatpush.bf16.msra.mxu0 %v606
    %1538 = vmatpush.bf16.msra.mxu0 %v602
    %1539 = vmatpush.bf16.msra.mxu0 %v598
    %1540 = vmatpush.bf16.msra.mxu0 %v594
    %1541 = vmatmul.bf16.gmra.mxu0 %v1532
    %v1542 = vpop.f32.mrf.mxu0
    %v1543 = vadd.f32 0.0, %v1542
    %v1544 = vpop.f32.mrf.mxu0
    %1545 = vdwg.mxu0
    %1546 = vmatpush.bf16.msra.mxu0 %v623
    %1547 = vmatpush.bf16.msra.mxu0 %v619
    %1548 = vmatpush.bf16.msra.mxu0 %v615
    %1549 = vmatpush.bf16.msra.mxu0 %v611
    %1550 = vmatpush.bf16.msra.mxu0 %v607
    %1551 = vmatpush.bf16.msra.mxu0 %v603
    %1552 = vmatpush.bf16.msra.mxu0 %v599
    %1553 = vmatpush.bf16.msra.mxu0 %v595
    %1554 = vmatmul.bf16.gmra.mxu0 %v1532
    %v1555 = vpop.f32.mrf.mxu0
    %v1556 = vadd.f32 0.0, %v1555
    %v1557 = vpop.f32.mrf.mxu0
    %1558 = vdwg.mxu0
    %1559 = vmatpush.bf16.msra.mxu0 %v624
    %1560 = vmatpush.bf16.msra.mxu0 %v620
    %1561 = vmatpush.bf16.msra.mxu0 %v616
    %1562 = vmatpush.bf16.msra.mxu0 %v612
    %1563 = vmatpush.bf16.msra.mxu0 %v608
    %1564 = vmatpush.bf16.msra.mxu0 %v604
    %1565 = vmatpush.bf16.msra.mxu0 %v600
    %1566 = vmatpush.bf16.msra.mxu0 %v596
    %1567 = vmatmul.bf16.gmra.mxu0 %v1532
    %v1568 = vpop.f32.mrf.mxu0
    %v1569 = vadd.f32 0.0, %v1568
    %v1570 = vpop.f32.mrf.mxu0
    %1571 = vdwg.mxu0
    %1572 = vmatpush.bf16.msra.mxu0 %v625
    %1573 = vmatpush.bf16.msra.mxu0 %v621
    %1574 = vmatpush.bf16.msra.mxu0 %v617
    %1575 = vmatpush.bf16.msra.mxu0 %v613
    %1576 = vmatpush.bf16.msra.mxu0 %v609
    %1577 = vmatpush.bf16.msra.mxu0 %v605
    %1578 = vmatpush.bf16.msra.mxu0 %v601
    %1579 = vmatpush.bf16.msra.mxu0 %v597
    %1580 = vmatmul.bf16.gmra.mxu0 %v1532
    %v1581 = vpop.f32.mrf.mxu0
    %v1582 = vadd.f32 0.0, %v1581
    %v1583 = vpop.f32.mrf.mxu0
    %1584 = vdwg.mxu0
    %v1585 = vadd.f32 %v1528, %v1543
    %v1586 = vadd.f32 %v1529, %v1556
    %v1587 = vadd.f32 %v1530, %v1569
    %v1588 = vadd.f32 %v1531, %v1582
    %v1589 = vxor.u32 %v1585, 2147483648
    %v1590 = vxor.u32 %v1586, 2147483648
    %v1591 = vxor.u32 %v1587, 2147483648
    %v1592 = vmul.f32 %v1589, 1.442695
    %v1593 = vpow.pop %v1592
    %v1594 = vmul.f32 %v1590, 1.442695
    %v1595 = vpow.pop %v1594
    %v1596 = vmul.f32 %v1591, 1.442695
    %v1597 = vpow.pop %v1596
    %v1598 = vadd.f32 %v1593, 1.0
    %v1599 = vadd.f32 %v1595, 1.0
    %v1600 = vadd.f32 %v1597, 1.0
    %v1601 = vrcp.pop %v1598
    %v1602 = vmul.f32 %v1598, %v1601
    %v1603 = vsub.f32 1.0, %v1602
    %v1604 = vmul.f32 %v1601, %v1603
    %v1605 = vadd.f32 %v1601, %v1604
    %vm1606 = vweird.f32 %v1598
    %vm1607 = vweird.f32 %v1601
    %vm1608 = vmor %vm1606, %vm1607
    %v1609 = vsel %vm1608, %v1601, %v1605
    %v1610 = vand.u32 2147483647, %v1598
    %vm1611 = vcmp.eq.f32.partialorder %v1610, 8.507059e+37
    %v1612 = vand.u32 %v1598, 2147483648
    %v1613 = vor.u32 1.1754944e-38, %v1612
    %v1614 = vsel %vm1611, %v1613, %v1609
    %v1615 = vmul.f32 1.0, %v1614
    %v1616 = vrcp.pop %v1599
    %v1617 = vmul.f32 %v1599, %v1616
    %v1618 = vsub.f32 1.0, %v1617
    %v1619 = vmul.f32 %v1616, %v1618
    %v1620 = vadd.f32 %v1616, %v1619
    %vm1621 = vweird.f32 %v1599
    %vm1622 = vweird.f32 %v1616
    %vm1623 = vmor %vm1621, %vm1622
    %v1624 = vsel %vm1623, %v1616, %v1620
    %v1625 = vand.u32 2147483647, %v1599
    %vm1626 = vcmp.eq.f32.partialorder %v1625, 8.507059e+37
    %v1627 = vand.u32 %v1599, 2147483648
    %v1628 = vor.u32 1.1754944e-38, %v1627
    %v1629 = vsel %vm1626, %v1628, %v1624
    %v1630 = vmul.f32 1.0, %v1629
    %v1631 = vrcp.pop %v1600
    %v1632 = vmul.f32 %v1600, %v1631
    %v1633 = vsub.f32 1.0, %v1632
    %v1634 = vmul.f32 %v1631, %v1633
    %v1635 = vadd.f32 %v1631, %v1634
    %vm1636 = vweird.f32 %v1600
    %vm1637 = vweird.f32 %v1631
    %vm1638 = vmor %vm1636, %vm1637
    %v1639 = vsel %vm1638, %v1631, %v1635
    %v1640 = vand.u32 2147483647, %v1600
    %vm1641 = vcmp.eq.f32.partialorder %v1640, 8.507059e+37
    %v1642 = vand.u32 %v1600, 2147483648
    %v1643 = vor.u32 1.1754944e-38, %v1642
    %v1644 = vsel %vm1641, %v1643, %v1639
    %v1645 = vmul.f32 1.0, %v1644
    %v1646 = vtanh.pop %v1588
    %v1647 = vmul.f32 %v1630, %v1524
    %v1648 = vmul.f32 %v1615, %v1646
    %v1649 = vadd.f32 %v1647, %v1648
    %v1650 = vtanh.pop %v1649
    %v1651 = vmul.f32 %v1645, %v1650
    %v1652 = vpack.c.bf16 %v1651, %v1651
    %1653 = vst [vmem:[#allocation11] sm:$0xf] %v1652
    // Predicated region
    $region34: #{tpu_custom_call.1} parent=1 // pred_check
      _
    $region35: #{tpu_custom_call.1} parent=1 // pred_check_branch
      %1655 = sbr.rel (0) target = $region37
    $region36: #{tpu_custom_call.1} parent=1 // pred_region
      %1657 = vsyncadd [#allocation5], 0
      %s1659 = sshll.u32 [#allocation11], 4
      %s1660 = int_to_ptr.vmem [resolvable:$true] %s1659
      %s1661 = sshll.u32 %s4, 4
      %s1662 = int_to_ptr.hbm [resolvable:$true] %s1661
      %1664 = dma.vmem_to_hbm [thread:$0]  %s1660, 64, %s1662, [#allocation5]
    $region37: #{tpu_custom_call.1} parent=1 // pred_fallthru
      _
    // Predicated region
    $region38: #{tpu_custom_call.1} parent=1 // pred_check
      _
    $region39: #{tpu_custom_call.1} parent=1 // pred_check_branch
      %1666 = sbr.rel (0) target = $region41
    $region40: #{tpu_custom_call.1} parent=1 // pred_region
      %1668 = dma.done [#allocation5], 64
    $region41: #{tpu_custom_call.1} parent=1 // pred_fallthru
      _
    %1669 = vsyncpa [#allocation4], 1
    %1670 = vsyncpa [#allocation7], 1
    %1671 = vsyncpa [#allocation10], 1
    %1672 = vsyncpa [#allocation5], 1

</llo_original>
